<compile_context>
chip_gen: v7x
topology: tpu7x:2x2x1
jax: 0.10.0
libtpu: 0.0.40
codegen_flags: <defaults>
</compile_context>

<pallas_src>
import math

import jax
import jax.numpy as jnp
from jax import lax
from jax.experimental import pallas as pl
from jax.experimental.pallas import tpu as pltpu

# ----------------------------- configuration -----------------------------
BATCH = 2
SEQ = 8            # n (query length)
DIM = 32           # model dim
HEADS = 4
DIM_HEAD = 16
NUM_NULL_KV = 2
SCALE = 8.0
INNER = HEADS * DIM_HEAD              # 64
J = SEQ + NUM_NULL_KV                 # per-batch kv length incl. null kv (10)
BN = BATCH * SEQ                      # flattened query rows (16)
HBN = HEADS * BN                      # head-stacked rows (64)
HNULL = HEADS * NUM_NULL_KV           # head-stacked null keys (8)

NEG = -1e30                           # large-negative mask value (exp -> 0)
_F32_MAX = float(jnp.finfo(jnp.float32).max)


# ----------------------------- glue: alibi / masks -----------------------------
def _alibi_slopes(heads):
    def pow2(n):
        start = 2 ** (-(2 ** (-(math.log2(n) - 3))))
        return [start * start ** i for i in range(n)]
    if math.log2(heads).is_integer():
        return pow2(heads)
    cp = 2 ** math.floor(math.log2(heads))
    return pow2(cp) + pow2(2 * cp)[0::2][: heads - cp]


def build_alibi_bias(heads, i, j):
    """Reference-path ALiBi bias, columns = [null..., seq...] (null prepended)."""
    i_ar = jnp.arange(j - i, j, dtype=jnp.float32)
    j_ar = jnp.arange(j, dtype=jnp.float32)
    bias = -jnp.abs(j_ar[None, None, :] - i_ar[None, :, None])         # (1, i, j)
    slopes = jnp.asarray(_alibi_slopes(heads), dtype=jnp.float32)[:, None, None]
    bias = bias * slopes
    pad = heads - bias.shape[0]
    if pad > 0:
        bias = jnp.pad(bias, ((0, pad), (0, 0), (0, 0)))
    return bias                                                         # (heads, i, j)


def build_causal_mask(i, j):
    r = jnp.arange(i)[:, None]
    c = jnp.arange(j)[None, :]
    # torch.triu(ones(i, j), diagonal=j - i + 1): True where c - r > j - i
    return (c > r + (j - i)).astype(jnp.float32)                        # (i, j)


def build_bias_pack():
    """Fused additive bias for the head/batch-stacked layout.

    Returns (2, HBN, HBN):
      [0]          : seq-key bias   (HBN, HBN)   rows/cols = h*BN + b*SEQ + t
      [1][:, :HNULL]: null-key bias (HBN, HNULL) cols = h*NUM_NULL_KV + n
    Contains ALiBi, the causal mask, and cross-head / cross-batch masking
    (masked entries = NEG).
    """
    slopes = jnp.asarray(_alibi_slopes(HEADS), jnp.float32)             # (H,)
    t = jnp.arange(SEQ, dtype=jnp.float32)
    d = t[None, :] - t[:, None]                                         # tj - ti (S,S)
    alibi_blk = -jnp.abs(d)[None] * slopes[:, None, None]               # (H,S,S)
    blk = jnp.where((d > 0)[None], NEG, alibi_blk)                      # causal + alibi

    eye_h = jnp.eye(HEADS, dtype=bool)
    eye_b = jnp.eye(BATCH, dtype=bool)
    valid6 = (eye_h[:, None, None, :, None, None] &
              eye_b[None, :, None, None, :, None])                      # (H,B,1,H,B,1)
    blk6 = blk[:, None, :, None, None, :]                               # (H,1,S,1,1,S)
    bias_seq = jnp.where(valid6, blk6, NEG).reshape(HBN, HBN)           # (64,64)

    n = jnp.arange(NUM_NULL_KV, dtype=jnp.float32)
    dn = n[None, :] - (t[:, None] + NUM_NULL_KV)                        # (S,N)
    alibi_null = -jnp.abs(dn)[None] * slopes[:, None, None]             # (H,S,N)
    valid_h = eye_h[:, None, None, :, None]                             # (H,1,1,H,1)
    an5 = alibi_null[:, None, :, None, :]                               # (H,1,S,1,N)
    bias_null = jnp.broadcast_to(
        jnp.where(valid_h, an5, NEG),
        (HEADS, BATCH, SEQ, HEADS, NUM_NULL_KV)).reshape(HBN, HNULL)    # (64,8)

    bias_null_pad = jnp.pad(bias_null, ((0, 0), (0, HBN - HNULL)))
    return jnp.stack([bias_seq, bias_null_pad], axis=0)                 # (2,64,64)


# ----------------------------- Pallas kernel -----------------------------
def attention_kernel(x_ref, wqkv_ref, scales_ref, nkv_ref, bias_ref, wout_ref, o_ref):
    x = x_ref[...]                                            # (BN, DIM) f32
    s = scales_ref[...]                                       # (2, DIM)
    gamma = s[0:1, :]                                         # (1, DIM)
    kscale = s[1:2, :DIM_HEAD]                                # (1, DH) = q_scale*k_scale*SCALE

    # LayerNorm (gamma learnable, beta == 0), eps=1e-5, biased variance; rsqrt -> EUP
    mean = jnp.mean(x, axis=-1, keepdims=True)
    xc = x - mean
    var = jnp.mean(xc * xc, axis=-1, keepdims=True)
    xn = xc * lax.rsqrt(var + 1e-5) * gamma                   # (BN, DIM)

    # projections: plain (16,32)@(32,64) matmuls, original weight layout
    q2 = jnp.dot(xn, wqkv_ref[0], preferred_element_type=jnp.float32)   # (BN, INNER)
    k2 = jnp.dot(xn, wqkv_ref[1], preferred_element_type=jnp.float32)
    v2 = jnp.dot(xn, wqkv_ref[2], preferred_element_type=jnp.float32)

    # fuse heads onto the sublane axis: (BN, H*DH) -> (H*BN, DH)
    def to_heads(t):
        return jnp.concatenate(
            [t[:, h * DIM_HEAD:(h + 1) * DIM_HEAD] for h in range(HEADS)], axis=0)

    q_s, k_s, v_s = to_heads(q2), to_heads(k2), to_heads(v2)  # (HBN, DH)

    # l2norm (F.normalize, eps=1e-12); all scales (q_scale*k_scale*8) folded onto K
    def inv_l2(t):
        return lax.rsqrt(jnp.maximum(jnp.sum(t * t, axis=-1, keepdims=True), 1e-24))
    q_s = q_s * inv_l2(q_s)
    k_s = k_s * inv_l2(k_s) * kscale

    nkv = nkv_ref[...]                                        # (2*HNULL, DH)
    nk = nkv[:HNULL]                                          # pre-normed + pre-scaled
    nv = nkv[HNULL:]

    # scores: one big seq matmul + one tiny null matmul (no lane concat)
    dn = (((1,), (1,)), ((), ()))                             # contract last dims (A @ B.T)
    sim_seq = lax.dot_general(q_s, k_s, dn,
                              preferred_element_type=jnp.float32) + bias_ref[0]   # (64,64)
    sim_null = lax.dot_general(q_s, nk, dn,
                               preferred_element_type=jnp.float32) \
               + bias_ref[1][:, :HNULL]                                           # (64,8)

    # softmax over the (seq ++ null) kv axis, kept as two aligned pieces
    m = jnp.maximum(jnp.max(sim_seq, axis=-1, keepdims=True),
                    jnp.max(sim_null, axis=-1, keepdims=True))
    p_seq = jnp.exp(sim_seq - m)
    p_null = jnp.exp(sim_null - m)
    inv_den = pl.reciprocal(
        jnp.sum(p_seq, axis=-1, keepdims=True) + jnp.sum(p_null, axis=-1, keepdims=True),
        approx=True)

    # PV: bf16 operands, f32 accumulation (attn weights in [0,1] -> safe)
    out_s = jnp.dot(p_seq.astype(jnp.bfloat16), v_s.astype(jnp.bfloat16),
                    preferred_element_type=jnp.float32)
    out_s = out_s + jnp.dot(p_null.astype(jnp.bfloat16), nv.astype(jnp.bfloat16),
                            preferred_element_type=jnp.float32)
    out_s = out_s * inv_den                                   # (HBN, DH)

    # back to lane-fused (BN, H*DH) and ONE output projection against wout (64,32)
    out2 = jnp.concatenate(
        [out_s[h * BN:(h + 1) * BN, :] for h in range(HEADS)], axis=1)             # (16,64)
    o_ref[...] = jnp.dot(out2.astype(jnp.bfloat16), wout_ref[...].astype(jnp.bfloat16),
                         preferred_element_type=jnp.float32)                       # (16,32)


# ----------------------------- wrapper -----------------------------
def attention_forward(x, params):
    gamma, wq, wkv, nk, nv, q_scale, k_scale, wout = params
    assert x.shape == (BATCH, SEQ, DIM)

    x2d = x.reshape(BN, DIM)

    # pack the three projection weights (original (DIM, INNER) layout)
    wqkv = jnp.stack([wq, wkv[:, :INNER], wkv[:, INNER:]], axis=0)       # (3, DIM, INNER)

    # fold sim scale and q_scale onto the K side:
    # (l2(q)*qs) . (l2(k)*ks) * 8  ==  l2(q) . (l2(k) * qs*ks*8)
    kq_eff = (q_scale * k_scale * SCALE).reshape(1, DIM_HEAD)            # (1,16)
    scales = jnp.concatenate(
        [gamma, jnp.pad(kq_eff, ((0, 0), (0, DIM - DIM_HEAD)))], axis=0)  # (2, DIM)

    # null-K is data independent: l2norm + full fused scale applied once here
    nk_norm = nk / jnp.maximum(
        jnp.sqrt(jnp.sum(nk * nk, axis=-1, keepdims=True)), 1e-12)
    nk_flat = (nk_norm * kq_eff[0]).reshape(HNULL, DIM_HEAD)
    nv_flat = nv.reshape(HNULL, DIM_HEAD)
    nkv = jnp.concatenate([nk_flat, nv_flat], axis=0)                    # (2*HNULL, DH)

    bias_pack = build_bias_pack()                                        # (2, HBN, HBN)

    vmem = lambda: pl.BlockSpec(memory_space=pltpu.MemorySpace.VMEM)
    out2d = pl.pallas_call(
        attention_kernel,
        out_shape=jax.ShapeDtypeStruct((BN, DIM), jnp.float32),
        in_specs=[vmem() for _ in range(6)],
        out_specs=vmem(),
    )(x2d, wqkv, scales, nkv, bias_pack, wout)

    return out2d.reshape(BATCH, SEQ, DIM)


# ----------------------------- pure-JAX reference -----------------------------
def attention_reference(x, params):
    gamma, wq, wkv, nk, nv, q_scale, k_scale, wout = params
    mean = jnp.mean(x, axis=-1, keepdims=True)
    var = jnp.mean((x - mean) ** 2, axis=-1, keepdims=True)
    xn = (x - mean) / jnp.sqrt(var + 1e-5) * gamma[0]

    q = xn @ wq
    kv = xn @ wkv
    k, v = kv[..., :INNER], kv[..., INNER:]
    reshp = lambda t: t.reshape(BATCH, SEQ, HEADS, DIM_HEAD).transpose(0, 2, 1, 3)
    q, k, v = reshp(q), reshp(k), reshp(v)

    nk_b = jnp.broadcast_to(nk[None], (BATCH, HEADS, NUM_NULL_KV, DIM_HEAD))
    nv_b = jnp.broadcast_to(nv[None], (BATCH, HEADS, NUM_NULL_KV, DIM_HEAD))
    k = jnp.concatenate([nk_b, k], axis=-2)
    v = jnp.concatenate([nv_b, v], axis=-2)

    l2n = lambda t: t / jnp.maximum(
        jnp.sqrt(jnp.sum(t * t, axis=-1, keepdims=True)), 1e-12)
    q = l2n(q) * q_scale[0]
    k = l2n(k) * k_scale[0]

    sim = jnp.einsum('bhid,bhjd->bhij', q, k) * SCALE
    sim = sim + build_alibi_bias(HEADS, SEQ, J)[None]
    sim = jnp.where(build_causal_mask(SEQ, J)[None, None] > 0, -_F32_MAX, sim)
    attn = jax.nn.softmax(sim, axis=-1)
    out = jnp.einsum('bhij,bhjd->bhid', attn, v)
    out = out.transpose(0, 2, 1, 3).reshape(BATCH, SEQ, INNER)
    return out @ wout


# ----------------------------- main -----------------------------
if __name__ == "__main__":
    key = jax.random.PRNGKey(0)
    kx, knull, kq, kkv, kout = jax.random.split(key, 5)

    x = jax.random.normal(kx, (BATCH, SEQ, DIM), dtype=jnp.float32)

    gamma = jnp.ones((1, DIM), dtype=jnp.float32)                        # LayerNorm gamma
    wq = jax.random.normal(kq, (DIM, INNER), dtype=jnp.float32) * 0.1    # to_q (in, out)
    wkv = jax.random.normal(kkv, (DIM, 2 * INNER), dtype=jnp.float32) * 0.1
    null_kv = jax.random.normal(knull, (HEADS, 2 * NUM_NULL_KV, DIM_HEAD),
                                dtype=jnp.float32)
    # repeat 'h (n r) d -> ... n r d', r=2 ; unbind(dim=-2)
    null_kv_r = null_kv.reshape(HEADS, NUM_NULL_KV, 2, DIM_HEAD)
    nk, nv = null_kv_r[:, :, 0, :], null_kv_r[:, :, 1, :]
    q_scale = jnp.ones((1, DIM_HEAD), dtype=jnp.float32)
    k_scale = jnp.ones((1, DIM_HEAD), dtype=jnp.float32)
    wout = jax.random.normal(kout, (INNER, DIM), dtype=jnp.float32) * 0.1

    params = (gamma, wq, wkv, nk, nv, q_scale, k_scale, wout)

    out = attention_forward(x, params)
    out = jax.block_until_ready(out)

    ref = attention_reference(x, params)
    assert out.shape == (BATCH, SEQ, DIM)
    assert jnp.allclose(out, ref, atol=2e-2, rtol=2e-2), "mismatch vs reference"

    # TODO(synk): optional context/mask/attn_bias branches and dropout>0 are not
    # implemented (module defaults / inference path only).
    print("KERNEL_OK")
</pallas_src>

<mosaic_0001>
module attributes {stable_mosaic.version = 11 : i64} {
  func.func @attention_kernel(%arg0: memref<16x32xf32, #tpu.memory_space<vmem>>, %arg1: memref<3x32x64xf32, #tpu.memory_space<vmem>>, %arg2: memref<2x32xf32, #tpu.memory_space<vmem>>, %arg3: memref<16x16xf32, #tpu.memory_space<vmem>>, %arg4: memref<2x64x64xf32, #tpu.memory_space<vmem>>, %arg5: memref<64x32xf32, #tpu.memory_space<vmem>>, %arg6: memref<16x32xf32, #tpu.memory_space<vmem>>) attributes {dimension_semantics = [], scalar_prefetch = 0 : i64, scratch_operands = 0 : i64, tpu.core_type = #tpu.core_type<tc>} {
    %c0 = arith.constant 0 : index
    %c0_0 = arith.constant 0 : index
    %0 = vector.load %arg0[%c0, %c0_0] : memref<16x32xf32, #tpu.memory_space<vmem>>, vector<16x32xf32>
    %c0_1 = arith.constant 0 : index
    %c0_2 = arith.constant 0 : index
    %1 = vector.load %arg2[%c0_1, %c0_2] : memref<2x32xf32, #tpu.memory_space<vmem>>, vector<2x32xf32>
    %2 = vector.extract_strided_slice %1 {offsets = [0, 0], sizes = [1, 32], strides = [1, 1]} : vector<2x32xf32> to vector<1x32xf32>
    %3 = vector.extract_strided_slice %1 {offsets = [1, 0], sizes = [1, 16], strides = [1, 1]} : vector<2x32xf32> to vector<1x16xf32>
    %cst = arith.constant dense<0.000000e+00> : vector<16xf32>
    %4 = vector.multi_reduction <add>, %0, %cst [1] : vector<16x32xf32> to vector<16xf32>
    %5 = vector.shape_cast %4 : vector<16xf32> to vector<16x1xf32>
    %cst_3 = arith.constant 3.200000e+01 : f32
    %6 = vector.broadcast %cst_3 : f32 to vector<16x1xf32>
    %7 = arith.divf %5, %6 : vector<16x1xf32>
    %8 = vector.broadcast %7 : vector<16x1xf32> to vector<16x32xf32>
    %9 = arith.subf %0, %8 : vector<16x32xf32>
    %10 = arith.mulf %9, %9 : vector<16x32xf32>
    %cst_4 = arith.constant dense<0.000000e+00> : vector<16xf32>
    %11 = vector.multi_reduction <add>, %10, %cst_4 [1] : vector<16x32xf32> to vector<16xf32>
    %12 = vector.shape_cast %11 : vector<16xf32> to vector<16x1xf32>
    %cst_5 = arith.constant 3.200000e+01 : f32
    %13 = vector.broadcast %cst_5 : f32 to vector<16x1xf32>
    %14 = arith.divf %12, %13 : vector<16x1xf32>
    %cst_6 = arith.constant 9.99999974E-6 : f32
    %15 = vector.broadcast %cst_6 : f32 to vector<16x1xf32>
    %16 = arith.addf %14, %15 : vector<16x1xf32>
    %17 = math.rsqrt %16 : vector<16x1xf32>
    %18 = vector.broadcast %17 : vector<16x1xf32> to vector<16x32xf32>
    %19 = arith.mulf %9, %18 : vector<16x32xf32>
    %20 = vector.broadcast %2 : vector<1x32xf32> to vector<16x32xf32>
    %21 = arith.mulf %19, %20 : vector<16x32xf32>
    %c0_7 = arith.constant 0 : index
    %c0_8 = arith.constant 0 : index
    %c0_9 = arith.constant 0 : index
    %22 = vector.load %arg1[%c0_7, %c0_8, %c0_9] : memref<3x32x64xf32, #tpu.memory_space<vmem>>, vector<1x32x64xf32>
    %23 = vector.shape_cast %22 : vector<1x32x64xf32> to vector<32x64xf32>
    %cst_10 = arith.constant dense<0.000000e+00> : vector<16x64xf32>
    %24 = tpu.matmul %21, %23, %cst_10 {dimension_numbers = #tpu.dot_dimension_numbers<[1], [0], [0], [1], [0, 0, 1, 1], [], []>} : vector<16x32xf32>, vector<32x64xf32>, vector<16x64xf32> -> vector<16x64xf32>
    %c1 = arith.constant 1 : index
    %c0_11 = arith.constant 0 : index
    %c0_12 = arith.constant 0 : index
    %25 = vector.load %arg1[%c1, %c0_11, %c0_12] : memref<3x32x64xf32, #tpu.memory_space<vmem>>, vector<1x32x64xf32>
    %26 = vector.shape_cast %25 : vector<1x32x64xf32> to vector<32x64xf32>
    %cst_13 = arith.constant dense<0.000000e+00> : vector<16x64xf32>
    %27 = tpu.matmul %21, %26, %cst_13 {dimension_numbers = #tpu.dot_dimension_numbers<[1], [0], [0], [1], [0, 0, 1, 1], [], []>} : vector<16x32xf32>, vector<32x64xf32>, vector<16x64xf32> -> vector<16x64xf32>
    %c2 = arith.constant 2 : index
    %c0_14 = arith.constant 0 : index
    %c0_15 = arith.constant 0 : index
    %28 = vector.load %arg1[%c2, %c0_14, %c0_15] : memref<3x32x64xf32, #tpu.memory_space<vmem>>, vector<1x32x64xf32>
    %29 = vector.shape_cast %28 : vector<1x32x64xf32> to vector<32x64xf32>
    %cst_16 = arith.constant dense<0.000000e+00> : vector<16x64xf32>
    %30 = tpu.matmul %21, %29, %cst_16 {dimension_numbers = #tpu.dot_dimension_numbers<[1], [0], [0], [1], [0, 0, 1, 1], [], []>} : vector<16x32xf32>, vector<32x64xf32>, vector<16x64xf32> -> vector<16x64xf32>
    %31 = vector.extract_strided_slice %24 {offsets = [0, 0], sizes = [16, 16], strides = [1, 1]} : vector<16x64xf32> to vector<16x16xf32>
    %32 = vector.extract_strided_slice %24 {offsets = [0, 16], sizes = [16, 16], strides = [1, 1]} : vector<16x64xf32> to vector<16x16xf32>
    %33 = vector.extract_strided_slice %24 {offsets = [0, 32], sizes = [16, 16], strides = [1, 1]} : vector<16x64xf32> to vector<16x16xf32>
    %34 = vector.extract_strided_slice %24 {offsets = [0, 48], sizes = [16, 16], strides = [1, 1]} : vector<16x64xf32> to vector<16x16xf32>
    %35 = tpu.concatenate %31, %32, %33, %34 in 0 : vector<16x16xf32>, vector<16x16xf32>, vector<16x16xf32>, vector<16x16xf32> -> vector<64x16xf32>
    %36 = vector.extract_strided_slice %27 {offsets = [0, 0], sizes = [16, 16], strides = [1, 1]} : vector<16x64xf32> to vector<16x16xf32>
    %37 = vector.extract_strided_slice %27 {offsets = [0, 16], sizes = [16, 16], strides = [1, 1]} : vector<16x64xf32> to vector<16x16xf32>
    %38 = vector.extract_strided_slice %27 {offsets = [0, 32], sizes = [16, 16], strides = [1, 1]} : vector<16x64xf32> to vector<16x16xf32>
    %39 = vector.extract_strided_slice %27 {offsets = [0, 48], sizes = [16, 16], strides = [1, 1]} : vector<16x64xf32> to vector<16x16xf32>
    %40 = tpu.concatenate %36, %37, %38, %39 in 0 : vector<16x16xf32>, vector<16x16xf32>, vector<16x16xf32>, vector<16x16xf32> -> vector<64x16xf32>
    %41 = vector.extract_strided_slice %30 {offsets = [0, 0], sizes = [16, 16], strides = [1, 1]} : vector<16x64xf32> to vector<16x16xf32>
    %42 = vector.extract_strided_slice %30 {offsets = [0, 16], sizes = [16, 16], strides = [1, 1]} : vector<16x64xf32> to vector<16x16xf32>
    %43 = vector.extract_strided_slice %30 {offsets = [0, 32], sizes = [16, 16], strides = [1, 1]} : vector<16x64xf32> to vector<16x16xf32>
    %44 = vector.extract_strided_slice %30 {offsets = [0, 48], sizes = [16, 16], strides = [1, 1]} : vector<16x64xf32> to vector<16x16xf32>
    %45 = tpu.concatenate %41, %42, %43, %44 in 0 : vector<16x16xf32>, vector<16x16xf32>, vector<16x16xf32>, vector<16x16xf32> -> vector<64x16xf32>
    %46 = arith.mulf %35, %35 : vector<64x16xf32>
    %cst_17 = arith.constant dense<0.000000e+00> : vector<64xf32>
    %47 = vector.multi_reduction <add>, %46, %cst_17 [1] : vector<64x16xf32> to vector<64xf32>
    %48 = vector.shape_cast %47 : vector<64xf32> to vector<64x1xf32>
    %cst_18 = arith.constant 1.000000e-24 : f32
    %49 = vector.broadcast %cst_18 : f32 to vector<64x1xf32>
    %50 = arith.maximumf %48, %49 : vector<64x1xf32>
    %51 = math.rsqrt %50 : vector<64x1xf32>
    %52 = vector.broadcast %51 : vector<64x1xf32> to vector<64x16xf32>
    %53 = arith.mulf %35, %52 : vector<64x16xf32>
    %54 = arith.mulf %40, %40 : vector<64x16xf32>
    %cst_19 = arith.constant dense<0.000000e+00> : vector<64xf32>
    %55 = vector.multi_reduction <add>, %54, %cst_19 [1] : vector<64x16xf32> to vector<64xf32>
    %56 = vector.shape_cast %55 : vector<64xf32> to vector<64x1xf32>
    %cst_20 = arith.constant 1.000000e-24 : f32
    %57 = vector.broadcast %cst_20 : f32 to vector<64x1xf32>
    %58 = arith.maximumf %56, %57 : vector<64x1xf32>
    %59 = math.rsqrt %58 : vector<64x1xf32>
    %60 = vector.broadcast %59 : vector<64x1xf32> to vector<64x16xf32>
    %61 = arith.mulf %40, %60 : vector<64x16xf32>
    %62 = vector.broadcast %3 : vector<1x16xf32> to vector<64x16xf32>
    %63 = arith.mulf %61, %62 : vector<64x16xf32>
    %c0_21 = arith.constant 0 : index
    %c0_22 = arith.constant 0 : index
    %64 = vector.load %arg3[%c0_21, %c0_22] : memref<16x16xf32, #tpu.memory_space<vmem>>, vector<16x16xf32>
    %65 = vector.extract_strided_slice %64 {offsets = [0, 0], sizes = [8, 16], strides = [1, 1]} : vector<16x16xf32> to vector<8x16xf32>
    %66 = vector.extract_strided_slice %64 {offsets = [8, 0], sizes = [8, 16], strides = [1, 1]} : vector<16x16xf32> to vector<8x16xf32>
    %cst_23 = arith.constant dense<0.000000e+00> : vector<64x64xf32>
    %67 = tpu.matmul %53, %63, %cst_23 {dimension_numbers = #tpu.dot_dimension_numbers<[1], [1], [0], [0], [0, 0, 1, 0], [], []>} : vector<64x16xf32>, vector<64x16xf32>, vector<64x64xf32> -> vector<64x64xf32>
    %c0_24 = arith.constant 0 : index
    %c0_25 = arith.constant 0 : index
    %c0_26 = arith.constant 0 : index
    %68 = vector.load %arg4[%c0_24, %c0_25, %c0_26] : memref<2x64x64xf32, #tpu.memory_space<vmem>>, vector<1x64x64xf32>
    %69 = vector.shape_cast %68 : vector<1x64x64xf32> to vector<64x64xf32>
    %70 = arith.addf %67, %69 : vector<64x64xf32>
    %cst_27 = arith.constant dense<0.000000e+00> : vector<64x8xf32>
    %71 = tpu.matmul %53, %65, %cst_27 {dimension_numbers = #tpu.dot_dimension_numbers<[1], [1], [0], [0], [0, 0, 1, 0], [], []>} : vector<64x16xf32>, vector<8x16xf32>, vector<64x8xf32> -> vector<64x8xf32>
    %c1_28 = arith.constant 1 : index
    %c0_29 = arith.constant 0 : index
    %c0_30 = arith.constant 0 : index
    %72 = vector.load %arg4[%c1_28, %c0_29, %c0_30] : memref<2x64x64xf32, #tpu.memory_space<vmem>>, vector<1x64x64xf32>
    %73 = vector.shape_cast %72 : vector<1x64x64xf32> to vector<64x64xf32>
    %74 = vector.extract_strided_slice %73 {offsets = [0, 0], sizes = [64, 8], strides = [1, 1]} : vector<64x64xf32> to vector<64x8xf32>
    %75 = arith.addf %71, %74 : vector<64x8xf32>
    %cst_31 = arith.constant dense<0xFF800000> : vector<64xf32>
    %76 = vector.multi_reduction <maximumf>, %70, %cst_31 [1] : vector<64x64xf32> to vector<64xf32>
    %77 = vector.shape_cast %76 : vector<64xf32> to vector<64x1xf32>
    %cst_32 = arith.constant dense<0xFF800000> : vector<64xf32>
    %78 = vector.multi_reduction <maximumf>, %75, %cst_32 [1] : vector<64x8xf32> to vector<64xf32>
    %79 = vector.shape_cast %78 : vector<64xf32> to vector<64x1xf32>
    %80 = arith.maximumf %77, %79 : vector<64x1xf32>
    %81 = vector.broadcast %80 : vector<64x1xf32> to vector<64x64xf32>
    %82 = arith.subf %70, %81 : vector<64x64xf32>
    %83 = math.exp %82 : vector<64x64xf32>
    %84 = vector.broadcast %80 : vector<64x1xf32> to vector<64x8xf32>
    %85 = arith.subf %75, %84 : vector<64x8xf32>
    %86 = math.exp %85 : vector<64x8xf32>
    %cst_33 = arith.constant dense<0.000000e+00> : vector<64xf32>
    %87 = vector.multi_reduction <add>, %83, %cst_33 [1] : vector<64x64xf32> to vector<64xf32>
    %88 = vector.shape_cast %87 : vector<64xf32> to vector<64x1xf32>
    %cst_34 = arith.constant dense<0.000000e+00> : vector<64xf32>
    %89 = vector.multi_reduction <add>, %86, %cst_34 [1] : vector<64x8xf32> to vector<64xf32>
    %90 = vector.shape_cast %89 : vector<64xf32> to vector<64x1xf32>
    %91 = arith.addf %88, %90 : vector<64x1xf32>
    %92 = tpu.reciprocal %91 {approx = true} : vector<64x1xf32> -> vector<64x1xf32>
    %93 = arith.truncf %83 : vector<64x64xf32> to vector<64x64xbf16>
    %94 = arith.truncf %45 : vector<64x16xf32> to vector<64x16xbf16>
    %cst_35 = arith.constant dense<0.000000e+00> : vector<64x16xf32>
    %95 = tpu.matmul %93, %94, %cst_35 {dimension_numbers = #tpu.dot_dimension_numbers<[1], [0], [0], [1], [0, 0, 1, 1], [], []>} : vector<64x64xbf16>, vector<64x16xbf16>, vector<64x16xf32> -> vector<64x16xf32>
    %96 = arith.truncf %86 : vector<64x8xf32> to vector<64x8xbf16>
    %97 = arith.truncf %66 : vector<8x16xf32> to vector<8x16xbf16>
    %cst_36 = arith.constant dense<0.000000e+00> : vector<64x16xf32>
    %98 = tpu.matmul %96, %97, %cst_36 {dimension_numbers = #tpu.dot_dimension_numbers<[1], [0], [0], [1], [0, 0, 1, 1], [], []>} : vector<64x8xbf16>, vector<8x16xbf16>, vector<64x16xf32> -> vector<64x16xf32>
    %99 = arith.addf %95, %98 : vector<64x16xf32>
    %100 = vector.broadcast %92 : vector<64x1xf32> to vector<64x16xf32>
    %101 = arith.mulf %99, %100 : vector<64x16xf32>
    %102 = vector.extract_strided_slice %101 {offsets = [0, 0], sizes = [16, 16], strides = [1, 1]} : vector<64x16xf32> to vector<16x16xf32>
    %103 = vector.extract_strided_slice %101 {offsets = [16, 0], sizes = [16, 16], strides = [1, 1]} : vector<64x16xf32> to vector<16x16xf32>
    %104 = vector.extract_strided_slice %101 {offsets = [32, 0], sizes = [16, 16], strides = [1, 1]} : vector<64x16xf32> to vector<16x16xf32>
    %105 = vector.extract_strided_slice %101 {offsets = [48, 0], sizes = [16, 16], strides = [1, 1]} : vector<64x16xf32> to vector<16x16xf32>
    %106 = tpu.concatenate %102, %103, %104, %105 in 1 : vector<16x16xf32>, vector<16x16xf32>, vector<16x16xf32>, vector<16x16xf32> -> vector<16x64xf32>
    %107 = arith.truncf %106 : vector<16x64xf32> to vector<16x64xbf16>
    %c0_37 = arith.constant 0 : index
    %c0_38 = arith.constant 0 : index
    %108 = vector.load %arg5[%c0_37, %c0_38] : memref<64x32xf32, #tpu.memory_space<vmem>>, vector<64x32xf32>
    %109 = arith.truncf %108 : vector<64x32xf32> to vector<64x32xbf16>
    %cst_39 = arith.constant dense<0.000000e+00> : vector<16x32xf32>
    %110 = tpu.matmul %107, %109, %cst_39 {dimension_numbers = #tpu.dot_dimension_numbers<[1], [0], [0], [1], [0, 0, 1, 1], [], []>} : vector<16x64xbf16>, vector<64x32xbf16>, vector<16x32xf32> -> vector<16x32xf32>
    %c0_40 = arith.constant 0 : index
    %c0_41 = arith.constant 0 : index
    %111 = vector.load %arg6[%c0_40, %c0_41] : memref<16x32xf32, #tpu.memory_space<vmem>>, vector<16x32xf32>
    tpu.vector_store %arg6[%c0_40, %c0_41], %110 {strides = array<i32>} : memref<16x32xf32, #tpu.memory_space<vmem>>, vector<16x32xf32>,
    return
  }
}

</mosaic_0001>

<llo_original>
// kernel: tpu_custom_call.1
$region0: #{tpu_custom_call.1}
  #allocation0 [shape = 'u32[]', space=smem, size = 0x4, offset = 0x4, fixed_abs, tag = 'smem constant byte address 0x4 - core index']
  #allocation1 [shape = 'u32[144,128]{1,0:T(1,128)}', space=vmem, size = 0x12000, scoped, tag = 'internal scratch']
  %s0 = inlined_call_operand.hbm [shape: f32[16,32], index: 0, kind: input, shape index: {}]
  %s1 = inlined_call_operand.vmem [shape: f32[3,32,64], index: 1, kind: input, shape index: {}]
  %s2 = inlined_call_operand.vmem [shape: f32[2,32], index: 2, kind: input, shape index: {}]
  %s3 = inlined_call_operand.hbm [shape: f32[16,16], index: 3, kind: input, shape index: {}]
  %s4 = inlined_call_operand.hbm [shape: f32[2,64,64], index: 4, kind: input, shape index: {}]
  %s5 = inlined_call_operand.vmem [shape: f32[64,32], index: 5, kind: input, shape index: {}]
  %s6 = inlined_call_operand.hbm [shape: f32[16,32], index: 6, kind: output, shape index: {}]
  %s7 = sld [smem:[#allocation0]]
  $region46: #{tpu_custom_call.1} parent=0
    _
  %s9 = ssub.s32 1, %s7
  %s10 = scalar_select 0, %s9, %s7
  $region1: #{tpu_custom_call.1} parent=0
    #allocation2 [shape = 'u8[8192]{0}', space=vmem, size = 0x2000, scoped, tag = 'input window, operand 0, single buffered']
    #allocation3 [shape = 's32[1]{0}', space=sflag, size = 0x4, scoped, tag = 'scoped memory for tpu_custom_call.1']
    #allocation4 [shape = 's32[1]{0}', space=sflag, size = 0x4, scoped, tag = 'scoped memory for tpu_custom_call.1']
    #allocation5 [shape = 'u8[8192]{0}', space=vmem, size = 0x2000, scoped, tag = 'input window, operand 3, single buffered']
    #allocation6 [shape = 's32[1]{0}', space=sflag, size = 0x4, scoped, tag = 'scoped memory for tpu_custom_call.1']
    #allocation7 [shape = 'u8[65536]{0}', space=vmem, size = 0x10000, scoped, tag = 'input window, operand 4, single buffered']
    #allocation8 [shape = 'u8[8192]{0}', space=vmem, size = 0x2000, scoped, tag = 'output window, operand 0, single buffered']
    %11 = vsyncpa [#allocation3], 0
    %12 = vsyncpa [#allocation6], 0
    %13 = vsyncpa [#allocation4], 0
    // Predicated region
    $region2: #{tpu_custom_call.1} parent=1 // pred_check
      _
    $region3: #{tpu_custom_call.1} parent=1 // pred_check_branch
      %15 = sbr.rel (0) target = $region5
    $region4: #{tpu_custom_call.1} parent=1 // pred_region
      %s17 = ssub.s32 256, 256
      %18 = vsyncadd [#allocation3], %s17
      %s19 = sshll.u32 [#allocation2], 4
      %s20 = int_to_ptr.vmem [resolvable:$true] %s19
      %25 = dma.hbm_to_vmem [thread:$0]  %s0, 256, %s20, [#allocation3], 128, 128, 8
    $region5: #{tpu_custom_call.1} parent=1 // pred_fallthru
      _
    // Predicated region
    $region6: #{tpu_custom_call.1} parent=1 // pred_check
      _
    $region7: #{tpu_custom_call.1} parent=1 // pred_check_branch
      %27 = sbr.rel (0) target = $region9
    $region8: #{tpu_custom_call.1} parent=1 // pred_region
      _
    $region9: #{tpu_custom_call.1} parent=1 // pred_fallthru
      _
    // Predicated region
    $region10: #{tpu_custom_call.1} parent=1 // pred_check
      _
    $region11: #{tpu_custom_call.1} parent=1 // pred_check_branch
      %29 = sbr.rel (0) target = $region13
    $region12: #{tpu_custom_call.1} parent=1 // pred_region
      _
    $region13: #{tpu_custom_call.1} parent=1 // pred_fallthru
      _
    // Predicated region
    $region14: #{tpu_custom_call.1} parent=1 // pred_check
      _
    $region15: #{tpu_custom_call.1} parent=1 // pred_check_branch
      %31 = sbr.rel (0) target = $region17
    $region16: #{tpu_custom_call.1} parent=1 // pred_region
      %s33 = ssub.s32 256, 256
      %34 = vsyncadd [#allocation6], %s33
      %s35 = sshll.u32 [#allocation5], 4
      %s36 = int_to_ptr.vmem [resolvable:$true] %s35
      %41 = dma.hbm_to_vmem [thread:$0]  %s3, 256, %s36, [#allocation6], 128, 128, 8
    $region17: #{tpu_custom_call.1} parent=1 // pred_fallthru
      _
    // Predicated region
    $region18: #{tpu_custom_call.1} parent=1 // pred_check
      _
    $region19: #{tpu_custom_call.1} parent=1 // pred_check_branch
      %43 = sbr.rel (0) target = $region21
    $region20: #{tpu_custom_call.1} parent=1 // pred_region
      %s45 = ssub.s32 2048, 2048
      %46 = vsyncadd [#allocation6], %s45
      %s47 = sshll.u32 [#allocation7], 4
      %s48 = int_to_ptr.vmem [resolvable:$true] %s47
      %53 = dma.hbm_to_vmem [thread:$0]  %s4, 2048, %s48, [#allocation6], 128, 128, 8
    $region21: #{tpu_custom_call.1} parent=1 // pred_fallthru
      _
    // Predicated region
    $region22: #{tpu_custom_call.1} parent=1 // pred_check
      _
    $region23: #{tpu_custom_call.1} parent=1 // pred_check_branch
      %55 = sbr.rel (0) target = $region25
    $region24: #{tpu_custom_call.1} parent=1 // pred_region
      _
    $region25: #{tpu_custom_call.1} parent=1 // pred_fallthru
      _
    // Predicated region
    $region26: #{tpu_custom_call.1} parent=1 // pred_check
      _
    $region27: #{tpu_custom_call.1} parent=1 // pred_check_branch
      %57 = sbr.rel (0) target = $region29
    $region28: #{tpu_custom_call.1} parent=1 // pred_region
      %58 = dma.done [#allocation3], 256
    $region29: #{tpu_custom_call.1} parent=1 // pred_fallthru
      _
    // Predicated region
    $region30: #{tpu_custom_call.1} parent=1 // pred_check
      _
    $region31: #{tpu_custom_call.1} parent=1 // pred_check_branch
      %60 = sbr.rel (0) target = $region33
    $region32: #{tpu_custom_call.1} parent=1 // pred_region
      %61 = dma.done [#allocation6], 256
    $region33: #{tpu_custom_call.1} parent=1 // pred_fallthru
      _
    // Predicated region
    $region34: #{tpu_custom_call.1} parent=1 // pred_check
      _
    $region35: #{tpu_custom_call.1} parent=1 // pred_check_branch
      %63 = sbr.rel (0) target = $region37
    $region36: #{tpu_custom_call.1} parent=1 // pred_region
      %64 = dma.done [#allocation6], 2048
    $region37: #{tpu_custom_call.1} parent=1 // pred_fallthru
      _
    %v66 = vld [vmem:[#allocation2] sm:$0xff]
    %v67 = vld [vmem:[#allocation2 + $0x8] sm:$0xff]
    %v68 = vld [vmem:[%s2] sm:$0x3]
    %vm69 = vcmask 261120
    %v70 = vsel %vm69, %v66, 0.0
    %71 = vadd.xlane.f32.xlu0 %v70
    %v72 = vpop.xlane.xlu0 %71
    %v73 = vsel %vm69, %v67, 0.0
    %74 = vadd.xlane.f32.xlu0 %v73
    %v75 = vpop.xlane.xlu0 %74
    %v76 = vrcp.pop 32.0
    %v77 = vmul.f32 %v72, %v76
    %v78 = vmul.f32 %v75, %v76
    %v79 = vsub.f32 %v66, %v77
    %v80 = vsub.f32 %v67, %v78
    %v81 = vmul.f32 %v79, %v79
    %v82 = vmul.f32 %v80, %v80
    %v83 = vsel %vm69, %v81, 0.0
    %84 = vadd.xlane.f32.xlu0 %v83
    %v85 = vpop.xlane.xlu0 %84
    %v86 = vsel %vm69, %v82, 0.0
    %87 = vadd.xlane.f32.xlu0 %v86
    %v88 = vpop.xlane.xlu0 %87
    %v89 = vmul.f32 %v85, %v76
    %v90 = vmul.f32 %v88, %v76
    %v91 = vadd.f32 %v89, 1e-05
    %v92 = vadd.f32 %v90, 1e-05
    %v93 = vrsqrt.pop %v91
    %v94 = vrsqrt.pop %v92
    %v95 = vmul.f32 %v79, %v93
    %v96 = vmul.f32 %v80, %v94
    %v97 = vlaneseq
    %v98 = vshrl.u32 %v97, 7
    %v99 = vsub.s32 0, %v98
    %v100 = vrot.slane %v68, %v99
    %v101 = vmul.f32 %v95, %v100
    %v102 = vmul.f32 %v96, %v100
    %v103 = vld [vmem:[%s1] sm:$0xff]
    %v104 = vld [vmem:[%s1 + $0x8] sm:$0xff]
    %v105 = vld [vmem:[%s1 + $0x10] sm:$0xff]
    %v106 = vld [vmem:[%s1 + $0x18] sm:$0xff]
    %v108 = vsel %vm69, %v101, 0
    %v111 = vsel %vm69, %v102, 0
    %113 = vmatprep.subr.mxu0 0.0
    %114 = vmatpush1.msra.mxu0 %v103
    %115 = vmatprep.subr.mxu0 0.0
    %116 = vmatpush1.msra.mxu0 %v104
    %117 = vmatprep.subr.mxu0 0.0
    %118 = vmatpush1.msra.mxu0 %v105
    %119 = vmatprep.subr.mxu0 0.0
    %120 = vmatpush1.msra.mxu0 %v106
    %121 = vmatprep.subr.mxu0 0.0
    %122 = vmatpush1.msra.mxu0 0.0
    %123 = vmatprep.subr.mxu0 0.0
    %124 = vmatpush1.msra.mxu0 0.0
    %125 = vmatprep.subr.mxu0 0.0
    %126 = vmatpush1.msra.mxu0 0.0
    %127 = vmatprep.subr.mxu0 0.0
    %128 = vmatpush1.msra.mxu0 0.0
    %129 = vmatprep.subr.mxu0 0.0
    %130 = vmatpush1.msra.mxu0 0.0
    %131 = vmatprep.subr.mxu0 0.0
    %132 = vmatpush1.msra.mxu0 0.0
    %133 = vmatprep.subr.mxu0 0.0
    %134 = vmatpush1.msra.mxu0 0.0
    %135 = vmatprep.subr.mxu0 0.0
    %136 = vmatpush1.msra.mxu0 0.0
    %137 = vmatprep.subr.mxu0 0.0
    %138 = vmatpush1.msra.mxu0 0.0
    %139 = vmatprep.subr.mxu0 0.0
    %140 = vmatpush1.msra.mxu0 0.0
    %141 = vmatprep.subr.mxu0 0.0
    %142 = vmatpush1.msra.mxu0 0.0
    %143 = vmatprep.subr.mxu0 0.0
    %144 = vmatpush1.msra.mxu0 0.0
    %145 = vmatprep.subr.mxu0 0.0
    %146 = vmatpush1.msra.mxu0 0.0
    %147 = vmatprep.subr.mxu0 0.0
    %148 = vmatpush1.msra.mxu0 0.0
    %149 = vmatprep.subr.mxu0 0.0
    %150 = vmatpush1.msra.mxu0 0.0
    %151 = vmatprep.subr.mxu0 0.0
    %152 = vmatpush1.msra.mxu0 0.0
    %153 = vmatprep.subr.mxu0 0.0
    %154 = vmatpush1.msra.mxu0 0.0
    %155 = vmatprep.subr.mxu0 0.0
    %156 = vmatpush1.msra.mxu0 0.0
    %157 = vmatprep.subr.mxu0 0.0
    %158 = vmatpush1.msra.mxu0 0.0
    %159 = vmatprep.subr.mxu0 0.0
    %160 = vmatpush1.msra.mxu0 0.0
    %161 = vmatprep.subr.mxu0 0.0
    %162 = vmatpush1.msra.mxu0 0.0
    %163 = vmatprep.subr.mxu0 0.0
    %164 = vmatpush1.msra.mxu0 0.0
    %165 = vmatprep.subr.mxu0 0.0
    %166 = vmatpush1.msra.mxu0 0.0
    %167 = vmatprep.subr.mxu0 0.0
    %168 = vmatpush1.msra.mxu0 0.0
    %169 = vmatprep.subr.mxu0 0.0
    %170 = vmatpush1.msra.mxu0 0.0
    %171 = vmatprep.subr.mxu0 0.0
    %172 = vmatpush1.msra.mxu0 0.0
    %173 = vmatprep.subr.mxu0 0.0
    %174 = vmatpush1.msra.mxu0 0.0
    %175 = vmatprep.subr.mxu0 0.0
    %176 = vmatpush1.msra.mxu0 0.0
    %177 = vmatprep.mubr.f32.mxu0 0.0
    %178 = vmatmul.mubr.f32.gmra.mrb[0].mxu0 %v108
    %v179 = vpop.f32.mrb[0].mxu0
    %v180 = vadd.f32 0.0, %v179
    %v181 = vpop.f32.mrb[0].mxu0
    %182 = vmatprep.mubr.f32.mxu0 0.0
    %183 = vmatmul.mubr.f32.gmra.mrb[0].mxu0 %v111
    %v184 = vpop.f32.mrb[0].mxu0
    %v185 = vadd.f32 0.0, %v184
    %v186 = vpop.f32.mrb[0].mxu0
    %187 = vdwg.mxu0
    %s188 = scalar_lea.vmem %s1, 32
    %v189 = vld [vmem:[%s188] sm:$0xff]
    %v190 = vld [vmem:[%s188 + $0x8] sm:$0xff]
    %v191 = vld [vmem:[%s188 + $0x10] sm:$0xff]
    %v192 = vld [vmem:[%s188 + $0x18] sm:$0xff]
    %193 = vmatprep.subr.mxu0 0.0
    %194 = vmatpush1.msra.mxu0 %v189
    %195 = vmatprep.subr.mxu0 0.0
    %196 = vmatpush1.msra.mxu0 %v190
    %197 = vmatprep.subr.mxu0 0.0
    %198 = vmatpush1.msra.mxu0 %v191
    %199 = vmatprep.subr.mxu0 0.0
    %200 = vmatpush1.msra.mxu0 %v192
    %201 = vmatprep.subr.mxu0 0.0
    %202 = vmatpush1.msra.mxu0 0.0
    %203 = vmatprep.subr.mxu0 0.0
    %204 = vmatpush1.msra.mxu0 0.0
    %205 = vmatprep.subr.mxu0 0.0
    %206 = vmatpush1.msra.mxu0 0.0
    %207 = vmatprep.subr.mxu0 0.0
    %208 = vmatpush1.msra.mxu0 0.0
    %209 = vmatprep.subr.mxu0 0.0
    %210 = vmatpush1.msra.mxu0 0.0
    %211 = vmatprep.subr.mxu0 0.0
    %212 = vmatpush1.msra.mxu0 0.0
    %213 = vmatprep.subr.mxu0 0.0
    %214 = vmatpush1.msra.mxu0 0.0
    %215 = vmatprep.subr.mxu0 0.0
    %216 = vmatpush1.msra.mxu0 0.0
    %217 = vmatprep.subr.mxu0 0.0
    %218 = vmatpush1.msra.mxu0 0.0
    %219 = vmatprep.subr.mxu0 0.0
    %220 = vmatpush1.msra.mxu0 0.0
    %221 = vmatprep.subr.mxu0 0.0
    %222 = vmatpush1.msra.mxu0 0.0
    %223 = vmatprep.subr.mxu0 0.0
    %224 = vmatpush1.msra.mxu0 0.0
    %225 = vmatprep.subr.mxu0 0.0
    %226 = vmatpush1.msra.mxu0 0.0
    %227 = vmatprep.subr.mxu0 0.0
    %228 = vmatpush1.msra.mxu0 0.0
    %229 = vmatprep.subr.mxu0 0.0
    %230 = vmatpush1.msra.mxu0 0.0
    %231 = vmatprep.subr.mxu0 0.0
    %232 = vmatpush1.msra.mxu0 0.0
    %233 = vmatprep.subr.mxu0 0.0
    %234 = vmatpush1.msra.mxu0 0.0
    %235 = vmatprep.subr.mxu0 0.0
    %236 = vmatpush1.msra.mxu0 0.0
    %237 = vmatprep.subr.mxu0 0.0
    %238 = vmatpush1.msra.mxu0 0.0
    %239 = vmatprep.subr.mxu0 0.0
    %240 = vmatpush1.msra.mxu0 0.0
    %241 = vmatprep.subr.mxu0 0.0
    %242 = vmatpush1.msra.mxu0 0.0
    %243 = vmatprep.subr.mxu0 0.0
    %244 = vmatpush1.msra.mxu0 0.0
    %245 = vmatprep.subr.mxu0 0.0
    %246 = vmatpush1.msra.mxu0 0.0
    %247 = vmatprep.subr.mxu0 0.0
    %248 = vmatpush1.msra.mxu0 0.0
    %249 = vmatprep.subr.mxu0 0.0
    %250 = vmatpush1.msra.mxu0 0.0
    %251 = vmatprep.subr.mxu0 0.0
    %252 = vmatpush1.msra.mxu0 0.0
    %253 = vmatprep.subr.mxu0 0.0
    %254 = vmatpush1.msra.mxu0 0.0
    %255 = vmatprep.subr.mxu0 0.0
    %256 = vmatpush1.msra.mxu0 0.0
    %257 = vmatprep.mubr.f32.mxu0 0.0
    %258 = vmatmul.mubr.f32.gmra.mrb[0].mxu0 %v108
    %v259 = vpop.f32.mrb[0].mxu0
    %v260 = vadd.f32 0.0, %v259
    %v261 = vpop.f32.mrb[0].mxu0
    %262 = vmatprep.mubr.f32.mxu0 0.0
    %263 = vmatmul.mubr.f32.gmra.mrb[0].mxu0 %v111
    %v264 = vpop.f32.mrb[0].mxu0
    %v265 = vadd.f32 0.0, %v264
    %v266 = vpop.f32.mrb[0].mxu0
    %267 = vdwg.mxu0
    %s268 = scalar_lea.vmem %s1, 64
    %v269 = vld [vmem:[%s268] sm:$0xff]
    %v270 = vld [vmem:[%s268 + $0x8] sm:$0xff]
    %v271 = vld [vmem:[%s268 + $0x10] sm:$0xff]
    %v272 = vld [vmem:[%s268 + $0x18] sm:$0xff]
    %273 = vmatprep.subr.mxu0 0.0
    %274 = vmatpush1.msra.mxu0 %v269
    %275 = vmatprep.subr.mxu0 0.0
    %276 = vmatpush1.msra.mxu0 %v270
    %277 = vmatprep.subr.mxu0 0.0
    %278 = vmatpush1.msra.mxu0 %v271
    %279 = vmatprep.subr.mxu0 0.0
    %280 = vmatpush1.msra.mxu0 %v272
    %281 = vmatprep.subr.mxu0 0.0
    %282 = vmatpush1.msra.mxu0 0.0
    %283 = vmatprep.subr.mxu0 0.0
    %284 = vmatpush1.msra.mxu0 0.0
    %285 = vmatprep.subr.mxu0 0.0
    %286 = vmatpush1.msra.mxu0 0.0
    %287 = vmatprep.subr.mxu0 0.0
    %288 = vmatpush1.msra.mxu0 0.0
    %289 = vmatprep.subr.mxu0 0.0
    %290 = vmatpush1.msra.mxu0 0.0
    %291 = vmatprep.subr.mxu0 0.0
    %292 = vmatpush1.msra.mxu0 0.0
    %293 = vmatprep.subr.mxu0 0.0
    %294 = vmatpush1.msra.mxu0 0.0
    %295 = vmatprep.subr.mxu0 0.0
    %296 = vmatpush1.msra.mxu0 0.0
    %297 = vmatprep.subr.mxu0 0.0
    %298 = vmatpush1.msra.mxu0 0.0
    %299 = vmatprep.subr.mxu0 0.0
    %300 = vmatpush1.msra.mxu0 0.0
    %301 = vmatprep.subr.mxu0 0.0
    %302 = vmatpush1.msra.mxu0 0.0
    %303 = vmatprep.subr.mxu0 0.0
    %304 = vmatpush1.msra.mxu0 0.0
    %305 = vmatprep.subr.mxu0 0.0
    %306 = vmatpush1.msra.mxu0 0.0
    %307 = vmatprep.subr.mxu0 0.0
    %308 = vmatpush1.msra.mxu0 0.0
    %309 = vmatprep.subr.mxu0 0.0
    %310 = vmatpush1.msra.mxu0 0.0
    %311 = vmatprep.subr.mxu0 0.0
    %312 = vmatpush1.msra.mxu0 0.0
    %313 = vmatprep.subr.mxu0 0.0
    %314 = vmatpush1.msra.mxu0 0.0
    %315 = vmatprep.subr.mxu0 0.0
    %316 = vmatpush1.msra.mxu0 0.0
    %317 = vmatprep.subr.mxu0 0.0
    %318 = vmatpush1.msra.mxu0 0.0
    %319 = vmatprep.subr.mxu0 0.0
    %320 = vmatpush1.msra.mxu0 0.0
    %321 = vmatprep.subr.mxu0 0.0
    %322 = vmatpush1.msra.mxu0 0.0
    %323 = vmatprep.subr.mxu0 0.0
    %324 = vmatpush1.msra.mxu0 0.0
    %325 = vmatprep.subr.mxu0 0.0
    %326 = vmatpush1.msra.mxu0 0.0
    %327 = vmatprep.subr.mxu0 0.0
    %328 = vmatpush1.msra.mxu0 0.0
    %329 = vmatprep.subr.mxu0 0.0
    %330 = vmatpush1.msra.mxu0 0.0
    %331 = vmatprep.subr.mxu0 0.0
    %332 = vmatpush1.msra.mxu0 0.0
    %333 = vmatprep.subr.mxu0 0.0
    %334 = vmatpush1.msra.mxu0 0.0
    %335 = vmatprep.subr.mxu0 0.0
    %336 = vmatpush1.msra.mxu0 0.0
    %337 = vmatprep.mubr.f32.mxu0 0.0
    %338 = vmatmul.mubr.f32.gmra.mrb[0].mxu0 %v108
    %v339 = vpop.f32.mrb[0].mxu0
    %v340 = vadd.f32 0.0, %v339
    %v341 = vpop.f32.mrb[0].mxu0
    %342 = vmatprep.mubr.f32.mxu0 0.0
    %343 = vmatmul.mubr.f32.gmra.mrb[0].mxu0 %v111
    %v344 = vpop.f32.mrb[0].mxu0
    %v345 = vadd.f32 0.0, %v344
    %v346 = vpop.f32.mrb[0].mxu0
    %347 = vdwg.mxu0
    %350 = vrot.lane.b32.xlu0 %v180, 112
    %v351 = vpop.permute.xlu0 %350
    %352 = vrot.lane.b32.xlu0 %v185, 112
    %v353 = vpop.permute.xlu0 %352
    %356 = vrot.lane.b32.xlu0 %v180, 96
    %v357 = vpop.permute.xlu0 %356
    %358 = vrot.lane.b32.xlu0 %v185, 96
    %v359 = vpop.permute.xlu0 %358
    %362 = vrot.lane.b32.xlu0 %v180, 80
    %v363 = vpop.permute.xlu0 %362
    %364 = vrot.lane.b32.xlu0 %v185, 80
    %v365 = vpop.permute.xlu0 %364
    %370 = vrot.lane.b32.xlu0 %v260, 112
    %v371 = vpop.permute.xlu0 %370
    %372 = vrot.lane.b32.xlu0 %v265, 112
    %v373 = vpop.permute.xlu0 %372
    %376 = vrot.lane.b32.xlu0 %v260, 96
    %v377 = vpop.permute.xlu0 %376
    %378 = vrot.lane.b32.xlu0 %v265, 96
    %v379 = vpop.permute.xlu0 %378
    %382 = vrot.lane.b32.xlu0 %v260, 80
    %v383 = vpop.permute.xlu0 %382
    %384 = vrot.lane.b32.xlu0 %v265, 80
    %v385 = vpop.permute.xlu0 %384
    %390 = vrot.lane.b32.xlu0 %v340, 112
    %v391 = vpop.permute.xlu0 %390
    %392 = vrot.lane.b32.xlu0 %v345, 112
    %v393 = vpop.permute.xlu0 %392
    %396 = vrot.lane.b32.xlu0 %v340, 96
    %v397 = vpop.permute.xlu0 %396
    %398 = vrot.lane.b32.xlu0 %v345, 96
    %v399 = vpop.permute.xlu0 %398
    %402 = vrot.lane.b32.xlu0 %v340, 80
    %v403 = vpop.permute.xlu0 %402
    %404 = vrot.lane.b32.xlu0 %v345, 80
    %v405 = vpop.permute.xlu0 %404
    %v408 = vmul.f32 %v180, %v180
    %v409 = vmul.f32 %v185, %v185
    %v410 = vmul.f32 %v351, %v351
    %v411 = vmul.f32 %v353, %v353
    %v412 = vmul.f32 %v357, %v357
    %v413 = vmul.f32 %v359, %v359
    %v414 = vmul.f32 %v363, %v363
    %v415 = vmul.f32 %v365, %v365
    %vm416 = vcmask 130048
    %v417 = vsel %vm416, %v408, 0.0
    %418 = vadd.xlane.f32.xlu0 %v417
    %v419 = vpop.xlane.xlu0 %418
    %v420 = vsel %vm416, %v409, 0.0
    %421 = vadd.xlane.f32.xlu0 %v420
    %v422 = vpop.xlane.xlu0 %421
    %v423 = vsel %vm416, %v410, 0.0
    %424 = vadd.xlane.f32.xlu0 %v423
    %v425 = vpop.xlane.xlu0 %424
    %v426 = vsel %vm416, %v411, 0.0
    %427 = vadd.xlane.f32.xlu0 %v426
    %v428 = vpop.xlane.xlu0 %427
    %v429 = vsel %vm416, %v412, 0.0
    %430 = vadd.xlane.f32.xlu0 %v429
    %v431 = vpop.xlane.xlu0 %430
    %v432 = vsel %vm416, %v413, 0.0
    %433 = vadd.xlane.f32.xlu0 %v432
    %v434 = vpop.xlane.xlu0 %433
    %v435 = vsel %vm416, %v414, 0.0
    %436 = vadd.xlane.f32.xlu0 %v435
    %v437 = vpop.xlane.xlu0 %436
    %v438 = vsel %vm416, %v415, 0.0
    %439 = vadd.xlane.f32.xlu0 %v438
    %v440 = vpop.xlane.xlu0 %439
    %v441 = vmax.f32 %v419, 1e-24
    %v442 = vmax.f32 %v422, 1e-24
    %v443 = vmax.f32 %v425, 1e-24
    %v444 = vmax.f32 %v428, 1e-24
    %v445 = vmax.f32 %v431, 1e-24
    %v446 = vmax.f32 %v434, 1e-24
    %v447 = vmax.f32 %v437, 1e-24
    %v448 = vmax.f32 %v440, 1e-24
    %v449 = vrsqrt.pop %v441
    %v450 = vrsqrt.pop %v442
    %v451 = vrsqrt.pop %v443
    %v452 = vrsqrt.pop %v444
    %v453 = vrsqrt.pop %v445
    %v454 = vrsqrt.pop %v446
    %v455 = vrsqrt.pop %v447
    %v456 = vrsqrt.pop %v448
    %v457 = vmul.f32 %v180, %v449
    %v458 = vmul.f32 %v185, %v450
    %v459 = vmul.f32 %v351, %v451
    %v460 = vmul.f32 %v353, %v452
    %v461 = vmul.f32 %v357, %v453
    %v462 = vmul.f32 %v359, %v454
    %v463 = vmul.f32 %v363, %v455
    %v464 = vmul.f32 %v365, %v456
    %v465 = vmul.f32 %v260, %v260
    %v466 = vmul.f32 %v265, %v265
    %v467 = vmul.f32 %v371, %v371
    %v468 = vmul.f32 %v373, %v373
    %v469 = vmul.f32 %v377, %v377
    %v470 = vmul.f32 %v379, %v379
    %v471 = vmul.f32 %v383, %v383
    %v472 = vmul.f32 %v385, %v385
    %v473 = vsel %vm416, %v465, 0.0
    %474 = vadd.xlane.f32.xlu0 %v473
    %v475 = vpop.xlane.xlu0 %474
    %v476 = vsel %vm416, %v466, 0.0
    %477 = vadd.xlane.f32.xlu0 %v476
    %v478 = vpop.xlane.xlu0 %477
    %v479 = vsel %vm416, %v467, 0.0
    %480 = vadd.xlane.f32.xlu0 %v479
    %v481 = vpop.xlane.xlu0 %480
    %v482 = vsel %vm416, %v468, 0.0
    %483 = vadd.xlane.f32.xlu0 %v482
    %v484 = vpop.xlane.xlu0 %483
    %v485 = vsel %vm416, %v469, 0.0
    %486 = vadd.xlane.f32.xlu0 %v485
    %v487 = vpop.xlane.xlu0 %486
    %v488 = vsel %vm416, %v470, 0.0
    %489 = vadd.xlane.f32.xlu0 %v488
    %v490 = vpop.xlane.xlu0 %489
    %v491 = vsel %vm416, %v471, 0.0
    %492 = vadd.xlane.f32.xlu0 %v491
    %v493 = vpop.xlane.xlu0 %492
    %v494 = vsel %vm416, %v472, 0.0
    %495 = vadd.xlane.f32.xlu0 %v494
    %v496 = vpop.xlane.xlu0 %495
    %v497 = vmax.f32 %v475, 1e-24
    %v498 = vmax.f32 %v478, 1e-24
    %v499 = vmax.f32 %v481, 1e-24
    %v500 = vmax.f32 %v484, 1e-24
    %v501 = vmax.f32 %v487, 1e-24
    %v502 = vmax.f32 %v490, 1e-24
    %v503 = vmax.f32 %v493, 1e-24
    %v504 = vmax.f32 %v496, 1e-24
    %v505 = vrsqrt.pop %v497
    %v506 = vrsqrt.pop %v498
    %v507 = vrsqrt.pop %v499
    %v508 = vrsqrt.pop %v500
    %v509 = vrsqrt.pop %v501
    %v510 = vrsqrt.pop %v502
    %v511 = vrsqrt.pop %v503
    %v512 = vrsqrt.pop %v504
    %v513 = vmul.f32 %v260, %v505
    %v514 = vmul.f32 %v265, %v506
    %v515 = vmul.f32 %v371, %v507
    %v516 = vmul.f32 %v373, %v508
    %v517 = vmul.f32 %v377, %v509
    %v518 = vmul.f32 %v379, %v510
    %v519 = vmul.f32 %v383, %v511
    %v520 = vmul.f32 %v385, %v512
    %v521 = vlaneseq
    %v522 = vshrl.u32 %v521, 7
    %v523 = vsub.s32 1, %v522
    %v524 = vrot.slane %v68, %v523
    %v525 = vmul.f32 %v513, %v524
    %v526 = vmul.f32 %v514, %v524
    %v527 = vmul.f32 %v515, %v524
    %v528 = vmul.f32 %v516, %v524
    %v529 = vmul.f32 %v517, %v524
    %v530 = vmul.f32 %v518, %v524
    %v531 = vmul.f32 %v519, %v524
    %v532 = vmul.f32 %v520, %v524
    %v533 = vld [vmem:[#allocation5] sm:$0xff]
    %v534 = vld [vmem:[#allocation5 + $0x8] sm:$0xff]
    %v535 = vld [vmem:[#allocation7] sm:$0xff]
    %v536 = vld [vmem:[#allocation7 + $0x8] sm:$0xff]
    %v537 = vld [vmem:[#allocation7 + $0x10] sm:$0xff]
    %v538 = vld [vmem:[#allocation7 + $0x18] sm:$0xff]
    %v539 = vld [vmem:[#allocation7 + $0x20] sm:$0xff]
    %v540 = vld [vmem:[#allocation7 + $0x28] sm:$0xff]
    %v541 = vld [vmem:[#allocation7 + $0x30] sm:$0xff]
    %v542 = vld [vmem:[#allocation7 + $0x38] sm:$0xff]
    %v544 = vsel %vm416, %v457, 0
    %v547 = vsel %vm416, %v458, 0
    %v550 = vsel %vm416, %v459, 0
    %v553 = vsel %vm416, %v460, 0
    %v556 = vsel %vm416, %v461, 0
    %v559 = vsel %vm416, %v462, 0
    %v562 = vsel %vm416, %v463, 0
    %v565 = vsel %vm416, %v464, 0
    %v568 = vsel %vm416, %v525, 0
    %v571 = vsel %vm416, %v526, 0
    %v574 = vsel %vm416, %v527, 0
    %v577 = vsel %vm416, %v528, 0
    %v580 = vsel %vm416, %v529, 0
    %v583 = vsel %vm416, %v530, 0
    %v586 = vsel %vm416, %v531, 0
    %v589 = vsel %vm416, %v532, 0
    %591 = vmatprep.subr.mxu0 0.0
    %592 = vmatpush1.xpose.msra.mxu0 %v568
    %593 = vmatprep.subr.mxu0 0.0
    %594 = vmatpush1.xpose.msra.mxu0 %v571
    %595 = vmatprep.subr.mxu0 0.0
    %596 = vmatpush1.xpose.msra.mxu0 %v574
    %597 = vmatprep.subr.mxu0 0.0
    %598 = vmatpush1.xpose.msra.mxu0 %v577
    %599 = vmatprep.subr.mxu0 0.0
    %600 = vmatpush1.xpose.msra.mxu0 %v580
    %601 = vmatprep.subr.mxu0 0.0
    %602 = vmatpush1.xpose.msra.mxu0 %v583
    %603 = vmatprep.subr.mxu0 0.0
    %604 = vmatpush1.xpose.msra.mxu0 %v586
    %605 = vmatprep.subr.mxu0 0.0
    %606 = vmatpush1.xpose.msra.mxu0 %v589
    %607 = vmatprep.subr.mxu0 0.0
    %608 = vmatpush1.xpose.msra.mxu0 0.0
    %609 = vmatprep.subr.mxu0 0.0
    %610 = vmatpush1.xpose.msra.mxu0 0.0
    %611 = vmatprep.subr.mxu0 0.0
    %612 = vmatpush1.xpose.msra.mxu0 0.0
    %613 = vmatprep.subr.mxu0 0.0
    %614 = vmatpush1.xpose.msra.mxu0 0.0
    %615 = vmatprep.subr.mxu0 0.0
    %616 = vmatpush1.xpose.msra.mxu0 0.0
    %617 = vmatprep.subr.mxu0 0.0
    %618 = vmatpush1.xpose.msra.mxu0 0.0
    %619 = vmatprep.subr.mxu0 0.0
    %620 = vmatpush1.xpose.msra.mxu0 0.0
    %621 = vmatprep.subr.mxu0 0.0
    %622 = vmatpush1.xpose.msra.mxu0 0.0
    %623 = vmatprep.subr.mxu0 0.0
    %624 = vmatpush1.xpose.msra.mxu0 0.0
    %625 = vmatprep.subr.mxu0 0.0
    %626 = vmatpush1.xpose.msra.mxu0 0.0
    %627 = vmatprep.subr.mxu0 0.0
    %628 = vmatpush1.xpose.msra.mxu0 0.0
    %629 = vmatprep.subr.mxu0 0.0
    %630 = vmatpush1.xpose.msra.mxu0 0.0
    %631 = vmatprep.subr.mxu0 0.0
    %632 = vmatpush1.xpose.msra.mxu0 0.0
    %633 = vmatprep.subr.mxu0 0.0
    %634 = vmatpush1.xpose.msra.mxu0 0.0
    %635 = vmatprep.subr.mxu0 0.0
    %636 = vmatpush1.xpose.msra.mxu0 0.0
    %637 = vmatprep.subr.mxu0 0.0
    %638 = vmatpush1.xpose.msra.mxu0 0.0
    %639 = vmatprep.subr.mxu0 0.0
    %640 = vmatpush1.xpose.msra.mxu0 0.0
    %641 = vmatprep.subr.mxu0 0.0
    %642 = vmatpush1.xpose.msra.mxu0 0.0
    %643 = vmatprep.subr.mxu0 0.0
    %644 = vmatpush1.xpose.msra.mxu0 0.0
    %645 = vmatprep.subr.mxu0 0.0
    %646 = vmatpush1.xpose.msra.mxu0 0.0
    %647 = vmatprep.subr.mxu0 0.0
    %648 = vmatpush1.xpose.msra.mxu0 0.0
    %649 = vmatprep.subr.mxu0 0.0
    %650 = vmatpush1.xpose.msra.mxu0 0.0
    %651 = vmatprep.subr.mxu0 0.0
    %652 = vmatpush1.xpose.msra.mxu0 0.0
    %653 = vmatprep.subr.mxu0 0.0
    %654 = vmatpush1.xpose.msra.mxu0 0.0
    %655 = vmatprep.mubr.f32.mxu0 0.0
    %656 = vmatmul.mubr.f32.gmra.mrb[0].mxu0 %v544
    %v657 = vpop.f32.mrb[0].mxu0
    %v658 = vadd.f32 %v535, %v657
    %v659 = vpop.f32.mrb[0].mxu0
    %660 = vmatprep.mubr.f32.mxu0 0.0
    %661 = vmatmul.mubr.f32.gmra.mrb[0].mxu0 %v547
    %v662 = vpop.f32.mrb[0].mxu0
    %v663 = vadd.f32 %v536, %v662
    %v664 = vpop.f32.mrb[0].mxu0
    %665 = vmatprep.mubr.f32.mxu0 0.0
    %666 = vmatmul.mubr.f32.gmra.mrb[0].mxu0 %v550
    %v667 = vpop.f32.mrb[0].mxu0
    %v668 = vadd.f32 %v537, %v667
    %v669 = vpop.f32.mrb[0].mxu0
    %670 = vmatprep.mubr.f32.mxu0 0.0
    %671 = vmatmul.mubr.f32.gmra.mrb[0].mxu0 %v553
    %v672 = vpop.f32.mrb[0].mxu0
    %v673 = vadd.f32 %v538, %v672
    %v674 = vpop.f32.mrb[0].mxu0
    %675 = vmatprep.mubr.f32.mxu0 0.0
    %676 = vmatmul.mubr.f32.gmra.mrb[0].mxu0 %v556
    %v677 = vpop.f32.mrb[0].mxu0
    %v678 = vadd.f32 %v539, %v677
    %v679 = vpop.f32.mrb[0].mxu0
    %680 = vmatprep.mubr.f32.mxu0 0.0
    %681 = vmatmul.mubr.f32.gmra.mrb[0].mxu0 %v559
    %v682 = vpop.f32.mrb[0].mxu0
    %v683 = vadd.f32 %v540, %v682
    %v684 = vpop.f32.mrb[0].mxu0
    %685 = vmatprep.mubr.f32.mxu0 0.0
    %686 = vmatmul.mubr.f32.gmra.mrb[0].mxu0 %v562
    %v687 = vpop.f32.mrb[0].mxu0
    %v688 = vadd.f32 %v541, %v687
    %v689 = vpop.f32.mrb[0].mxu0
    %690 = vmatprep.mubr.f32.mxu0 0.0
    %691 = vmatmul.mubr.f32.gmra.mrb[0].mxu0 %v565
    %v692 = vpop.f32.mrb[0].mxu0
    %v693 = vadd.f32 %v542, %v692
    %v694 = vpop.f32.mrb[0].mxu0
    %695 = vdwg.mxu0
    %s696 = scalar_lea.vmem [#allocation7], 64
    %v697 = vld [vmem:[%s696] sm:$0xff]
    %v698 = vld [vmem:[%s696 + $0x8] sm:$0xff]
    %v699 = vld [vmem:[%s696 + $0x10] sm:$0xff]
    %v700 = vld [vmem:[%s696 + $0x18] sm:$0xff]
    %v701 = vld [vmem:[%s696 + $0x20] sm:$0xff]
    %v702 = vld [vmem:[%s696 + $0x28] sm:$0xff]
    %v703 = vld [vmem:[%s696 + $0x30] sm:$0xff]
    %v704 = vld [vmem:[%s696 + $0x38] sm:$0xff]
    %v706 = vsel %vm416, %v533, 0
    %708 = vmatprep.subr.mxu0 0.0
    %709 = vmatpush1.xpose.msra.mxu0 %v706
    %710 = vmatprep.subr.mxu0 0.0
    %711 = vmatpush1.xpose.msra.mxu0 0.0
    %712 = vmatprep.subr.mxu0 0.0
    %713 = vmatpush1.xpose.msra.mxu0 0.0
    %714 = vmatprep.subr.mxu0 0.0
    %715 = vmatpush1.xpose.msra.mxu0 0.0
    %716 = vmatprep.subr.mxu0 0.0
    %717 = vmatpush1.xpose.msra.mxu0 0.0
    %718 = vmatprep.subr.mxu0 0.0
    %719 = vmatpush1.xpose.msra.mxu0 0.0
    %720 = vmatprep.subr.mxu0 0.0
    %721 = vmatpush1.xpose.msra.mxu0 0.0
    %722 = vmatprep.subr.mxu0 0.0
    %723 = vmatpush1.xpose.msra.mxu0 0.0
    %724 = vmatprep.subr.mxu0 0.0
    %725 = vmatpush1.xpose.msra.mxu0 0.0
    %726 = vmatprep.subr.mxu0 0.0
    %727 = vmatpush1.xpose.msra.mxu0 0.0
    %728 = vmatprep.subr.mxu0 0.0
    %729 = vmatpush1.xpose.msra.mxu0 0.0
    %730 = vmatprep.subr.mxu0 0.0
    %731 = vmatpush1.xpose.msra.mxu0 0.0
    %732 = vmatprep.subr.mxu0 0.0
    %733 = vmatpush1.xpose.msra.mxu0 0.0
    %734 = vmatprep.subr.mxu0 0.0
    %735 = vmatpush1.xpose.msra.mxu0 0.0
    %736 = vmatprep.subr.mxu0 0.0
    %737 = vmatpush1.xpose.msra.mxu0 0.0
    %738 = vmatprep.subr.mxu0 0.0
    %739 = vmatpush1.xpose.msra.mxu0 0.0
    %740 = vmatprep.subr.mxu0 0.0
    %741 = vmatpush1.xpose.msra.mxu0 0.0
    %742 = vmatprep.subr.mxu0 0.0
    %743 = vmatpush1.xpose.msra.mxu0 0.0
    %744 = vmatprep.subr.mxu0 0.0
    %745 = vmatpush1.xpose.msra.mxu0 0.0
    %746 = vmatprep.subr.mxu0 0.0
    %747 = vmatpush1.xpose.msra.mxu0 0.0
    %748 = vmatprep.subr.mxu0 0.0
    %749 = vmatpush1.xpose.msra.mxu0 0.0
    %750 = vmatprep.subr.mxu0 0.0
    %751 = vmatpush1.xpose.msra.mxu0 0.0
    %752 = vmatprep.subr.mxu0 0.0
    %753 = vmatpush1.xpose.msra.mxu0 0.0
    %754 = vmatprep.subr.mxu0 0.0
    %755 = vmatpush1.xpose.msra.mxu0 0.0
    %756 = vmatprep.subr.mxu0 0.0
    %757 = vmatpush1.xpose.msra.mxu0 0.0
    %758 = vmatprep.subr.mxu0 0.0
    %759 = vmatpush1.xpose.msra.mxu0 0.0
    %760 = vmatprep.subr.mxu0 0.0
    %761 = vmatpush1.xpose.msra.mxu0 0.0
    %762 = vmatprep.subr.mxu0 0.0
    %763 = vmatpush1.xpose.msra.mxu0 0.0
    %764 = vmatprep.subr.mxu0 0.0
    %765 = vmatpush1.xpose.msra.mxu0 0.0
    %766 = vmatprep.subr.mxu0 0.0
    %767 = vmatpush1.xpose.msra.mxu0 0.0
    %768 = vmatprep.subr.mxu0 0.0
    %769 = vmatpush1.xpose.msra.mxu0 0.0
    %770 = vmatprep.subr.mxu0 0.0
    %771 = vmatpush1.xpose.msra.mxu0 0.0
    %772 = vmatprep.mubr.f32.mxu0 0.0
    %773 = vmatmul.mubr.f32.gmra.mrb[0].mxu0 %v544
    %v774 = vpop.f32.mrb[0].mxu0
    %v775 = vadd.f32 %v697, %v774
    %v776 = vpop.f32.mrb[0].mxu0
    %777 = vmatprep.mubr.f32.mxu0 0.0
    %778 = vmatmul.mubr.f32.gmra.mrb[0].mxu0 %v547
    %v779 = vpop.f32.mrb[0].mxu0
    %v780 = vadd.f32 %v698, %v779
    %v781 = vpop.f32.mrb[0].mxu0
    %782 = vmatprep.mubr.f32.mxu0 0.0
    %783 = vmatmul.mubr.f32.gmra.mrb[0].mxu0 %v550
    %v784 = vpop.f32.mrb[0].mxu0
    %v785 = vadd.f32 %v699, %v784
    %v786 = vpop.f32.mrb[0].mxu0
    %787 = vmatprep.mubr.f32.mxu0 0.0
    %788 = vmatmul.mubr.f32.gmra.mrb[0].mxu0 %v553
    %v789 = vpop.f32.mrb[0].mxu0
    %v790 = vadd.f32 %v700, %v789
    %v791 = vpop.f32.mrb[0].mxu0
    %792 = vmatprep.mubr.f32.mxu0 0.0
    %793 = vmatmul.mubr.f32.gmra.mrb[0].mxu0 %v556
    %v794 = vpop.f32.mrb[0].mxu0
    %v795 = vadd.f32 %v701, %v794
    %v796 = vpop.f32.mrb[0].mxu0
    %797 = vmatprep.mubr.f32.mxu0 0.0
    %798 = vmatmul.mubr.f32.gmra.mrb[0].mxu0 %v559
    %v799 = vpop.f32.mrb[0].mxu0
    %v800 = vadd.f32 %v702, %v799
    %v801 = vpop.f32.mrb[0].mxu0
    %802 = vmatprep.mubr.f32.mxu0 0.0
    %803 = vmatmul.mubr.f32.gmra.mrb[0].mxu0 %v562
    %v804 = vpop.f32.mrb[0].mxu0
    %v805 = vadd.f32 %v703, %v804
    %v806 = vpop.f32.mrb[0].mxu0
    %807 = vmatprep.mubr.f32.mxu0 0.0
    %808 = vmatmul.mubr.f32.gmra.mrb[0].mxu0 %v565
    %v809 = vpop.f32.mrb[0].mxu0
    %v810 = vadd.f32 %v704, %v809
    %v811 = vpop.f32.mrb[0].mxu0
    %812 = vdwg.mxu0
    %vm813 = vcmask 523264
    %v814 = vsel %vm813, %v658, -inf
    %815 = vmax.xlane.f32.xlu0 %v814
    %v816 = vpop.xlane.xlu0 %815
    %v817 = vsel %vm813, %v663, -inf
    %818 = vmax.xlane.f32.xlu0 %v817
    %v819 = vpop.xlane.xlu0 %818
    %v820 = vsel %vm813, %v668, -inf
    %821 = vmax.xlane.f32.xlu0 %v820
    %v822 = vpop.xlane.xlu0 %821
    %v823 = vsel %vm813, %v673, -inf
    %824 = vmax.xlane.f32.xlu0 %v823
    %v825 = vpop.xlane.xlu0 %824
    %v826 = vsel %vm813, %v678, -inf
    %827 = vmax.xlane.f32.xlu0 %v826
    %v828 = vpop.xlane.xlu0 %827
    %v829 = vsel %vm813, %v683, -inf
    %830 = vmax.xlane.f32.xlu0 %v829
    %v831 = vpop.xlane.xlu0 %830
    %v832 = vsel %vm813, %v688, -inf
    %833 = vmax.xlane.f32.xlu0 %v832
    %v834 = vpop.xlane.xlu0 %833
    %v835 = vsel %vm813, %v693, -inf
    %836 = vmax.xlane.f32.xlu0 %v835
    %v837 = vpop.xlane.xlu0 %836
    %vm838 = vcmask 64512
    %v839 = vsel %vm838, %v775, -inf
    %840 = vmax.xlane.f32.xlu0 %v839
    %v841 = vpop.xlane.xlu0 %840
    %v842 = vsel %vm838, %v780, -inf
    %843 = vmax.xlane.f32.xlu0 %v842
    %v844 = vpop.xlane.xlu0 %843
    %v845 = vsel %vm838, %v785, -inf
    %846 = vmax.xlane.f32.xlu0 %v845
    %v847 = vpop.xlane.xlu0 %846
    %v848 = vsel %vm838, %v790, -inf
    %849 = vmax.xlane.f32.xlu0 %v848
    %v850 = vpop.xlane.xlu0 %849
    %v851 = vsel %vm838, %v795, -inf
    %852 = vmax.xlane.f32.xlu0 %v851
    %v853 = vpop.xlane.xlu0 %852
    %v854 = vsel %vm838, %v800, -inf
    %855 = vmax.xlane.f32.xlu0 %v854
    %v856 = vpop.xlane.xlu0 %855
    %v857 = vsel %vm838, %v805, -inf
    %858 = vmax.xlane.f32.xlu0 %v857
    %v859 = vpop.xlane.xlu0 %858
    %v860 = vsel %vm838, %v810, -inf
    %861 = vmax.xlane.f32.xlu0 %v860
    %v862 = vpop.xlane.xlu0 %861
    %v863 = vmax.f32 %v816, %v841
    %v864 = vmax.f32 %v819, %v844
    %v865 = vmax.f32 %v822, %v847
    %v866 = vmax.f32 %v825, %v850
    %v867 = vmax.f32 %v828, %v853
    %v868 = vmax.f32 %v831, %v856
    %v869 = vmax.f32 %v834, %v859
    %v870 = vmax.f32 %v837, %v862
    %v871 = vsub.f32 %v658, %v863
    %v872 = vsub.f32 %v663, %v864
    %v873 = vsub.f32 %v668, %v865
    %v874 = vsub.f32 %v673, %v866
    %v875 = vsub.f32 %v678, %v867
    %v876 = vsub.f32 %v683, %v868
    %v877 = vsub.f32 %v688, %v869
    %v878 = vsub.f32 %v693, %v870
    %v879 = vmul.f32 %v871, 1.442695
    %v880 = vpow.pop %v879
    %v881 = vmul.f32 %v872, 1.442695
    %v882 = vpow.pop %v881
    %v883 = vmul.f32 %v873, 1.442695
    %v884 = vpow.pop %v883
    %v885 = vmul.f32 %v874, 1.442695
    %v886 = vpow.pop %v885
    %v887 = vmul.f32 %v875, 1.442695
    %v888 = vpow.pop %v887
    %v889 = vmul.f32 %v876, 1.442695
    %v890 = vpow.pop %v889
    %v891 = vmul.f32 %v877, 1.442695
    %v892 = vpow.pop %v891
    %v893 = vmul.f32 %v878, 1.442695
    %v894 = vpow.pop %v893
    %v895 = vsub.f32 %v775, %v863
    %v896 = vsub.f32 %v780, %v864
    %v897 = vsub.f32 %v785, %v865
    %v898 = vsub.f32 %v790, %v866
    %v899 = vsub.f32 %v795, %v867
    %v900 = vsub.f32 %v800, %v868
    %v901 = vsub.f32 %v805, %v869
    %v902 = vsub.f32 %v810, %v870
    %v903 = vmul.f32 %v895, 1.442695
    %v904 = vpow.pop %v903
    %v905 = vmul.f32 %v896, 1.442695
    %v906 = vpow.pop %v905
    %v907 = vmul.f32 %v897, 1.442695
    %v908 = vpow.pop %v907
    %v909 = vmul.f32 %v898, 1.442695
    %v910 = vpow.pop %v909
    %v911 = vmul.f32 %v899, 1.442695
    %v912 = vpow.pop %v911
    %v913 = vmul.f32 %v900, 1.442695
    %v914 = vpow.pop %v913
    %v915 = vmul.f32 %v901, 1.442695
    %v916 = vpow.pop %v915
    %v917 = vmul.f32 %v902, 1.442695
    %v918 = vpow.pop %v917
    %v919 = vsel %vm813, %v880, 0.0
    %920 = vadd.xlane.f32.xlu0 %v919
    %v921 = vpop.xlane.xlu0 %920
    %v922 = vsel %vm813, %v882, 0.0
    %923 = vadd.xlane.f32.xlu0 %v922
    %v924 = vpop.xlane.xlu0 %923
    %v925 = vsel %vm813, %v884, 0.0
    %926 = vadd.xlane.f32.xlu0 %v925
    %v927 = vpop.xlane.xlu0 %926
    %v928 = vsel %vm813, %v886, 0.0
    %929 = vadd.xlane.f32.xlu0 %v928
    %v930 = vpop.xlane.xlu0 %929
    %v931 = vsel %vm813, %v888, 0.0
    %932 = vadd.xlane.f32.xlu0 %v931
    %v933 = vpop.xlane.xlu0 %932
    %v934 = vsel %vm813, %v890, 0.0
    %935 = vadd.xlane.f32.xlu0 %v934
    %v936 = vpop.xlane.xlu0 %935
    %v937 = vsel %vm813, %v892, 0.0
    %938 = vadd.xlane.f32.xlu0 %v937
    %v939 = vpop.xlane.xlu0 %938
    %v940 = vsel %vm813, %v894, 0.0
    %941 = vadd.xlane.f32.xlu0 %v940
    %v942 = vpop.xlane.xlu0 %941
    %v943 = vsel %vm838, %v904, 0.0
    %944 = vadd.xlane.f32.xlu0 %v943
    %v945 = vpop.xlane.xlu0 %944
    %v946 = vsel %vm838, %v906, 0.0
    %947 = vadd.xlane.f32.xlu0 %v946
    %v948 = vpop.xlane.xlu0 %947
    %v949 = vsel %vm838, %v908, 0.0
    %950 = vadd.xlane.f32.xlu0 %v949
    %v951 = vpop.xlane.xlu0 %950
    %v952 = vsel %vm838, %v910, 0.0
    %953 = vadd.xlane.f32.xlu0 %v952
    %v954 = vpop.xlane.xlu0 %953
    %v955 = vsel %vm838, %v912, 0.0
    %956 = vadd.xlane.f32.xlu0 %v955
    %v957 = vpop.xlane.xlu0 %956
    %v958 = vsel %vm838, %v914, 0.0
    %959 = vadd.xlane.f32.xlu0 %v958
    %v960 = vpop.xlane.xlu0 %959
    %v961 = vsel %vm838, %v916, 0.0
    %962 = vadd.xlane.f32.xlu0 %v961
    %v963 = vpop.xlane.xlu0 %962
    %v964 = vsel %vm838, %v918, 0.0
    %965 = vadd.xlane.f32.xlu0 %v964
    %v966 = vpop.xlane.xlu0 %965
    %v967 = vadd.f32 %v921, %v945
    %v968 = vadd.f32 %v924, %v948
    %v969 = vadd.f32 %v927, %v951
    %v970 = vadd.f32 %v930, %v954
    %v971 = vadd.f32 %v933, %v957
    %v972 = vadd.f32 %v936, %v960
    %v973 = vadd.f32 %v939, %v963
    %v974 = vadd.f32 %v942, %v966
    %v975 = vrcp.pop %v967
    %v976 = vrcp.pop %v968
    %v977 = vrcp.pop %v969
    %v978 = vrcp.pop %v970
    %v979 = vrcp.pop %v971
    %v980 = vrcp.pop %v972
    %v981 = vrcp.pop %v973
    %v982 = vrcp.pop %v974
    %v983 = vpack.c.bf16 %v882, %v880
    %v984 = vpack.c.bf16 %v886, %v884
    %v985 = vpack.c.bf16 %v890, %v888
    %v986 = vpack.c.bf16 %v894, %v892
    %v987 = vpack.c.bf16 %v345, %v340
    %v988 = vpack.c.bf16 %v393, %v391
    %v989 = vpack.c.bf16 %v399, %v397
    %v990 = vpack.c.bf16 %v405, %v403
    %v991 = vpack.c.bf16 %v906, %v904
    %v992 = vpack.c.bf16 %v910, %v908
    %v993 = vpack.c.bf16 %v914, %v912
    %v994 = vpack.c.bf16 %v918, %v916
    %v995 = vpack.c.bf16 %v534, %v534
    %v997 = vsel %vm838, %v991, 0
    %v1000 = vsel %vm838, %v992, 0
    %v1003 = vsel %vm838, %v993, 0
    %v1006 = vsel %vm838, %v994, 0
    %vm1008 = vcmask 1043456
    %v1010 = vsel %vm1008, %v995, 0
    %1012 = vmatprep.subr.bf16.mxu0 0
    %1013 = vmatpush1.bf16.msra.mxu0 %v1010
    %1014 = vmatprep.subr.bf16.mxu0 0
    %1015 = vmatpush1.bf16.msra.mxu0 0
    %1016 = vmatprep.subr.bf16.mxu0 0
    %1017 = vmatpush1.bf16.msra.mxu0 0
    %1018 = vmatprep.subr.bf16.mxu0 0
    %1019 = vmatpush1.bf16.msra.mxu0 0
    %1020 = vmatprep.subr.bf16.mxu0 0
    %1021 = vmatpush1.bf16.msra.mxu0 0
    %1022 = vmatprep.subr.bf16.mxu0 0
    %1023 = vmatpush1.bf16.msra.mxu0 0
    %1024 = vmatprep.subr.bf16.mxu0 0
    %1025 = vmatpush1.bf16.msra.mxu0 0
    %1026 = vmatprep.subr.bf16.mxu0 0
    %1027 = vmatpush1.bf16.msra.mxu0 0
    %1028 = vmatprep.subr.bf16.mxu0 0
    %1029 = vmatpush1.bf16.msra.mxu0 0
    %1030 = vmatprep.subr.bf16.mxu0 0
    %1031 = vmatpush1.bf16.msra.mxu0 0
    %1032 = vmatprep.subr.bf16.mxu0 0
    %1033 = vmatpush1.bf16.msra.mxu0 0
    %1034 = vmatprep.subr.bf16.mxu0 0
    %1035 = vmatpush1.bf16.msra.mxu0 0
    %1036 = vmatprep.subr.bf16.mxu0 0
    %1037 = vmatpush1.bf16.msra.mxu0 0
    %1038 = vmatprep.subr.bf16.mxu0 0
    %1039 = vmatpush1.bf16.msra.mxu0 0
    %1040 = vmatprep.subr.bf16.mxu0 0
    %1041 = vmatpush1.bf16.msra.mxu0 0
    %1042 = vmatprep.subr.bf16.mxu0 0
    %1043 = vmatpush1.bf16.msra.mxu0 0
    %1044 = vmatprep.mubr.bf16.mxu0 0
    %1045 = vmatmul.mubr.bf16.gmra.mrb[0].mxu0 %v997
    %v1046 = vpop.f32.mrb[0].mxu0
    %v1047 = vadd.f32 0.0, %v1046
    %v1048 = vpop.f32.mrb[0].mxu0
    %v1049 = vpop.f32.mrb[0].mxu0
    %v1050 = vadd.f32 0.0, %v1049
    %v1051 = vpop.f32.mrb[0].mxu0
    %1052 = vmatprep.mubr.bf16.mxu0 0
    %1053 = vmatmul.mubr.bf16.gmra.mrb[0].mxu0 %v1000
    %v1054 = vpop.f32.mrb[0].mxu0
    %v1055 = vadd.f32 0.0, %v1054
    %v1056 = vpop.f32.mrb[0].mxu0
    %v1057 = vpop.f32.mrb[0].mxu0
    %v1058 = vadd.f32 0.0, %v1057
    %v1059 = vpop.f32.mrb[0].mxu0
    %1060 = vmatprep.mubr.bf16.mxu0 0
    %1061 = vmatmul.mubr.bf16.gmra.mrb[0].mxu0 %v1003
    %v1062 = vpop.f32.mrb[0].mxu0
    %v1063 = vadd.f32 0.0, %v1062
    %v1064 = vpop.f32.mrb[0].mxu0
    %v1065 = vpop.f32.mrb[0].mxu0
    %v1066 = vadd.f32 0.0, %v1065
    %v1067 = vpop.f32.mrb[0].mxu0
    %1068 = vmatprep.mubr.bf16.mxu0 0
    %1069 = vmatmul.mubr.bf16.gmra.mrb[0].mxu0 %v1006
    %v1070 = vpop.f32.mrb[0].mxu0
    %v1071 = vadd.f32 0.0, %v1070
    %v1072 = vpop.f32.mrb[0].mxu0
    %v1073 = vpop.f32.mrb[0].mxu0
    %v1074 = vadd.f32 0.0, %v1073
    %v1075 = vpop.f32.mrb[0].mxu0
    %1076 = vdwg.mxu0
    %v1078 = vsel %vm813, %v983, 0
    %v1081 = vsel %vm813, %v984, 0
    %v1084 = vsel %vm813, %v985, 0
    %v1087 = vsel %vm813, %v986, 0
    %1089 = vmatprep.subr.bf16.mxu0 0
    %1090 = vmatpush1.bf16.msra.mxu0 %v987
    %1091 = vmatprep.subr.bf16.mxu0 0
    %1092 = vmatpush1.bf16.msra.mxu0 %v988
    %1093 = vmatprep.subr.bf16.mxu0 0
    %1094 = vmatpush1.bf16.msra.mxu0 %v989
    %1095 = vmatprep.subr.bf16.mxu0 0
    %1096 = vmatpush1.bf16.msra.mxu0 %v990
    %1097 = vmatprep.subr.bf16.mxu0 0
    %1098 = vmatpush1.bf16.msra.mxu0 0
    %1099 = vmatprep.subr.bf16.mxu0 0
    %1100 = vmatpush1.bf16.msra.mxu0 0
    %1101 = vmatprep.subr.bf16.mxu0 0
    %1102 = vmatpush1.bf16.msra.mxu0 0
    %1103 = vmatprep.subr.bf16.mxu0 0
    %1104 = vmatpush1.bf16.msra.mxu0 0
    %1105 = vmatprep.subr.bf16.mxu0 0
    %1106 = vmatpush1.bf16.msra.mxu0 0
    %1107 = vmatprep.subr.bf16.mxu0 0
    %1108 = vmatpush1.bf16.msra.mxu0 0
    %1109 = vmatprep.subr.bf16.mxu0 0
    %1110 = vmatpush1.bf16.msra.mxu0 0
    %1111 = vmatprep.subr.bf16.mxu0 0
    %1112 = vmatpush1.bf16.msra.mxu0 0
    %1113 = vmatprep.subr.bf16.mxu0 0
    %1114 = vmatpush1.bf16.msra.mxu0 0
    %1115 = vmatprep.subr.bf16.mxu0 0
    %1116 = vmatpush1.bf16.msra.mxu0 0
    %1117 = vmatprep.subr.bf16.mxu0 0
    %1118 = vmatpush1.bf16.msra.mxu0 0
    %1119 = vmatprep.subr.bf16.mxu0 0
    %1120 = vmatpush1.bf16.msra.mxu0 0
    %1121 = vmatprep.mubr.bf16.mxu0 0
    %1122 = vmatmul.mubr.bf16.gmra.mrb[0].mxu0 %v1078
    %v1123 = vpop.f32.mrb[0].mxu0
    %v1124 = vadd.f32 %v1047, %v1123
    %v1125 = vpop.f32.mrb[0].mxu0
    %v1126 = vpop.f32.mrb[0].mxu0
    %v1127 = vadd.f32 %v1050, %v1126
    %v1128 = vpop.f32.mrb[0].mxu0
    %1129 = vmatprep.mubr.bf16.mxu0 0
    %1130 = vmatmul.mubr.bf16.gmra.mrb[0].mxu0 %v1081
    %v1131 = vpop.f32.mrb[0].mxu0
    %v1132 = vadd.f32 %v1055, %v1131
    %v1133 = vpop.f32.mrb[0].mxu0
    %v1134 = vpop.f32.mrb[0].mxu0
    %v1135 = vadd.f32 %v1058, %v1134
    %v1136 = vpop.f32.mrb[0].mxu0
    %1137 = vmatprep.mubr.bf16.mxu0 0
    %1138 = vmatmul.mubr.bf16.gmra.mrb[0].mxu0 %v1084
    %v1139 = vpop.f32.mrb[0].mxu0
    %v1140 = vadd.f32 %v1063, %v1139
    %v1141 = vpop.f32.mrb[0].mxu0
    %v1142 = vpop.f32.mrb[0].mxu0
    %v1143 = vadd.f32 %v1066, %v1142
    %v1144 = vpop.f32.mrb[0].mxu0
    %1145 = vmatprep.mubr.bf16.mxu0 0
    %1146 = vmatmul.mubr.bf16.gmra.mrb[0].mxu0 %v1087
    %v1147 = vpop.f32.mrb[0].mxu0
    %v1148 = vadd.f32 %v1071, %v1147
    %v1149 = vpop.f32.mrb[0].mxu0
    %v1150 = vpop.f32.mrb[0].mxu0
    %v1151 = vadd.f32 %v1074, %v1150
    %v1152 = vpop.f32.mrb[0].mxu0
    %1153 = vdwg.mxu0
    %v1154 = vmul.f32 %v1124, %v975
    %v1155 = vmul.f32 %v1127, %v976
    %v1156 = vmul.f32 %v1132, %v977
    %v1157 = vmul.f32 %v1135, %v978
    %v1158 = vmul.f32 %v1140, %v979
    %v1159 = vmul.f32 %v1143, %v980
    %v1160 = vmul.f32 %v1148, %v981
    %v1161 = vmul.f32 %v1151, %v982
    %1164 = vrot.lane.b32.xlu0 %v1156, 16
    %v1165 = vpop.permute.xlu0 %1164
    %1166 = vrot.lane.b32.xlu0 %v1157, 16
    %v1167 = vpop.permute.xlu0 %1166
    %1172 = vrot.lane.b32.xlu0 %v1158, 32
    %v1173 = vpop.permute.xlu0 %1172
    %1174 = vrot.lane.b32.xlu0 %v1159, 32
    %v1175 = vpop.permute.xlu0 %1174
    %1180 = vrot.lane.b32.xlu0 %v1160, 48
    %v1181 = vpop.permute.xlu0 %1180
    %1182 = vrot.lane.b32.xlu0 %v1161, 48
    %v1183 = vpop.permute.xlu0 %1182
    %v1186 = vsel %vm416, %v1154, %v1165
    %v1187 = vsel %vm416, %v1155, %v1167
    %v1188 = vsel %vm69, %v1186, %v1173
    %v1189 = vsel %vm69, %v1187, %v1175
    %vm1190 = vcmask 392192
    %v1191 = vsel %vm1190, %v1188, %v1181
    %v1192 = vsel %vm1190, %v1189, %v1183
    %v1193 = vpack.c.bf16 %v1192, %v1191
    %v1194 = vld [vmem:[%s5] sm:$0xff]
    %v1195 = vld [vmem:[%s5 + $0x8] sm:$0xff]
    %v1196 = vld [vmem:[%s5 + $0x10] sm:$0xff]
    %v1197 = vld [vmem:[%s5 + $0x18] sm:$0xff]
    %v1198 = vld [vmem:[%s5 + $0x20] sm:$0xff]
    %v1199 = vld [vmem:[%s5 + $0x28] sm:$0xff]
    %v1200 = vld [vmem:[%s5 + $0x30] sm:$0xff]
    %v1201 = vld [vmem:[%s5 + $0x38] sm:$0xff]
    %v1202 = vpack.c.bf16 %v1195, %v1194
    %v1203 = vpack.c.bf16 %v1197, %v1196
    %v1204 = vpack.c.bf16 %v1199, %v1198
    %v1205 = vpack.c.bf16 %v1201, %v1200
    %v1207 = vsel %vm813, %v1193, 0
    %1209 = vmatprep.subr.bf16.mxu0 0
    %1210 = vmatpush1.bf16.msra.mxu0 %v1202
    %1211 = vmatprep.subr.bf16.mxu0 0
    %1212 = vmatpush1.bf16.msra.mxu0 %v1203
    %1213 = vmatprep.subr.bf16.mxu0 0
    %1214 = vmatpush1.bf16.msra.mxu0 %v1204
    %1215 = vmatprep.subr.bf16.mxu0 0
    %1216 = vmatpush1.bf16.msra.mxu0 %v1205
    %1217 = vmatprep.subr.bf16.mxu0 0
    %1218 = vmatpush1.bf16.msra.mxu0 0
    %1219 = vmatprep.subr.bf16.mxu0 0
    %1220 = vmatpush1.bf16.msra.mxu0 0
    %1221 = vmatprep.subr.bf16.mxu0 0
    %1222 = vmatpush1.bf16.msra.mxu0 0
    %1223 = vmatprep.subr.bf16.mxu0 0
    %1224 = vmatpush1.bf16.msra.mxu0 0
    %1225 = vmatprep.subr.bf16.mxu0 0
    %1226 = vmatpush1.bf16.msra.mxu0 0
    %1227 = vmatprep.subr.bf16.mxu0 0
    %1228 = vmatpush1.bf16.msra.mxu0 0
    %1229 = vmatprep.subr.bf16.mxu0 0
    %1230 = vmatpush1.bf16.msra.mxu0 0
    %1231 = vmatprep.subr.bf16.mxu0 0
    %1232 = vmatpush1.bf16.msra.mxu0 0
    %1233 = vmatprep.subr.bf16.mxu0 0
    %1234 = vmatpush1.bf16.msra.mxu0 0
    %1235 = vmatprep.subr.bf16.mxu0 0
    %1236 = vmatpush1.bf16.msra.mxu0 0
    %1237 = vmatprep.subr.bf16.mxu0 0
    %1238 = vmatpush1.bf16.msra.mxu0 0
    %1239 = vmatprep.subr.bf16.mxu0 0
    %1240 = vmatpush1.bf16.msra.mxu0 0
    %1241 = vmatprep.mubr.bf16.mxu0 0
    %1242 = vmatmul.mubr.bf16.gmra.mrb[0].mxu0 %v1207
    %v1243 = vpop.f32.mrb[0].mxu0
    %v1244 = vadd.f32 0.0, %v1243
    %v1245 = vpop.f32.mrb[0].mxu0
    %v1246 = vpop.f32.mrb[0].mxu0
    %v1247 = vadd.f32 0.0, %v1246
    %v1248 = vpop.f32.mrb[0].mxu0
    %1249 = vdwg.mxu0
    %1250 = vst.msk [vmem:[#allocation8] sm:$0xff] %vm69, %v1244
    %1251 = vst.msk [vmem:[#allocation8 + $0x8] sm:$0xff] %vm69, %v1247
    // Predicated region
    $region38: #{tpu_custom_call.1} parent=1 // pred_check
      _
    $region39: #{tpu_custom_call.1} parent=1 // pred_check_branch
      %1253 = sbr.rel (0) target = $region41
    $region40: #{tpu_custom_call.1} parent=1 // pred_region
      %s1255 = ssub.s32 256, 256
      %1256 = vsyncadd [#allocation4], %s1255
      %s1257 = sshll.u32 [#allocation8], 4
      %s1258 = int_to_ptr.vmem [resolvable:$true] %s1257
      %1263 = dma.vmem_to_hbm [thread:$0]  %s1258, 256, %s6, [#allocation4], 128, 128, 8
    $region41: #{tpu_custom_call.1} parent=1 // pred_fallthru
      _
    // Predicated region
    $region42: #{tpu_custom_call.1} parent=1 // pred_check
      _
    $region43: #{tpu_custom_call.1} parent=1 // pred_check_branch
      %1265 = sbr.rel (0) target = $region45
    $region44: #{tpu_custom_call.1} parent=1 // pred_region
      %1266 = dma.done [#allocation4], 256
    $region45: #{tpu_custom_call.1} parent=1 // pred_fallthru
      _
    %1267 = vsyncpa [#allocation3], 1
    %1268 = vsyncpa [#allocation6], 1
    %1269 = vsyncpa [#allocation4], 1

</llo_original>
